<compile_context>
chip_gen: v6e
topology: v6e:2x2x1
jax: 0.10.0
libtpu: 0.0.40
codegen_flags: <defaults>
</compile_context>

<pallas_src>
import functools

import jax
import jax.numpy as jnp
from jax import lax
from jax.experimental import pallas as pl
from jax.experimental.pallas import tpu as pltpu


SEG = 128      # lane-aligned width of each q/k/v/skip segment (hidden=64 padded)
HIDDEN = 64    # GCNConv(., 64) / TransformerConv(64, 64, heads=1)


# ------------------------------ small helpers -------------------------------
def _round_up(x, m):
    return (x + m - 1) // m * m


@functools.lru_cache(maxsize=1)
def _vmem_limit_bytes():
    # ~75% of physical VMEM: ~48 MiB on v7x (64 MiB), ~96 MiB on v5e/v6e.
    try:
        info = pltpu.get_tpu_info()
        cap = int(getattr(info, "vmem_capacity_bytes", 128 << 20))
        return cap * 3 // 4
    except Exception:
        return 64 << 20


def _fused_max_rows():
    # Single-kernel fast path: anorm + scores + probabilities all VMEM-resident.
    return 1024 if _vmem_limit_bytes() >= (80 << 20) else 512


def _row_spec(tm, ncols):
    return pl.BlockSpec((tm, ncols), lambda i: (i, 0))


def _full_spec(shape):
    return pl.BlockSpec(shape, lambda i: (0, 0))


def _resident_spec(shape):
    # Constant index_map across the row grid -> single-buffer it so the
    # resident copy does not pay double-buffer VMEM.
    return pl.BlockSpec(shape, lambda i: (0, 0), pipeline_mode=pl.Buffered(1))


def _pick_row_tile(n_pad, f_pad):
    """Largest row tile keeping the three row-tiled passes inside the VMEM
    budget (double-buffered anorm slab + single-buffered residents), with an
    even grid length so v7x's two TensorCores both stay busy."""
    budget = int(_vmem_limit_bytes() * 0.85)
    resident = max(
        n_pad * HIDDEN * 2,            # pass A: x@W1 (bf16)
        n_pad * 4 * SEG * 2,           # pass B: qkvs (bf16)
        n_pad * f_pad * 2,             # pass C: t@W2 (bf16)
    ) + SEG * f_pad * 2 + HIDDEN * 4 * SEG * 2 + 4 * (4 * SEG + f_pad + HIDDEN)
    # per-row streamed bytes: 2x anorm slab (bf16) + 2x output tile
    # + in-kernel f32 temporaries over the row (scores / p).
    per_row = 2 * n_pad * 2 + 2 * max(4 * SEG, f_pad) * 4 + 3 * n_pad * 4
    tm = max(8, (budget - resident) // per_row)
    t = 8
    while t * 2 <= min(tm, n_pad) and n_pad % (t * 2) == 0:
        t *= 2
    if (n_pad // t) % 2 == 1 and n_pad // t > 1 and t >= 16:
        t //= 2                        # even grid length for v7x dual-TC
    return t


# --------------------------- fused small-graph kernel ------------------------
def _fused_kernel(an_ref, xw1_ref, b1_ref, wqkvs_ref, bqkvs_ref, w2_ref, b2_ref,
                  o_ref, *, hidden, seg):
    """GCN1 + ReLU + TransformerConv(heads=1) + GCN2 for a whole (small) graph."""
    f32, bf16 = jnp.float32, jnp.bfloat16
    an = an_ref[...]                                          # [N, N] bf16

    # GCN1 propagation + bias + ReLU (x @ W1 precomputed in the wrapper).
    h = jnp.dot(an, xw1_ref[...], preferred_element_type=f32) + b1_ref[...]
    h = jnp.maximum(h, 0.0)

    # Fused, lane-aligned q|k|v|skip projection ([64, 512] weight).
    qkvs = jnp.dot(h.astype(bf16), wqkvs_ref[...],
                   preferred_element_type=f32) + bqkvs_ref[...]
    q = qkvs[:, 0:seg]
    k = qkvs[:, seg:2 * seg]
    v = qkvs[:, 2 * seg:3 * seg]
    skip = qkvs[:, 3 * seg:4 * seg]

    # Attention over existing neighbors only (GCN self-loop diagonal excluded).
    scale = 1.0 / (float(hidden) ** 0.5)
    scores = lax.dot_general(q.astype(bf16), k.astype(bf16),
                             (((1,), (1,)), ((), ())),
                             preferred_element_type=f32) * scale
    n = an.shape[0]
    rows = lax.broadcasted_iota(jnp.int32, (n, n), 0)
    cols = lax.broadcasted_iota(jnp.int32, (n, n), 1)
    mask = jnp.logical_and(an > 0, rows != cols)
    scores = jnp.where(mask, scores, jnp.asarray(-1e30, f32))
    row_max = jnp.max(scores, axis=-1, keepdims=True)
    p = jnp.exp(scores - row_max)
    p = jnp.where(mask, p, 0.0)                  # isolated nodes -> all-zero row
    denom = jnp.sum(p, axis=-1, keepdims=True)
    p = p * pl.reciprocal(jnp.maximum(denom, jnp.asarray(1e-30, f32)), approx=True)

    attn = jnp.dot(p.astype(bf16), v.astype(bf16), preferred_element_type=f32)
    t = attn + skip                               # root_weight skip connection

    # t @ W2 then GCN2 propagation + bias.
    tw2 = jnp.dot(t.astype(bf16), w2_ref[...], preferred_element_type=f32)
    y = jnp.dot(an, tw2.astype(bf16), preferred_element_type=f32) + b2_ref[...]
    o_ref[...] = y.astype(o_ref.dtype)


# ------------------------- row-tiled large-graph kernels ---------------------
def _gcn_qkvs_kernel(an_ref, xw_ref, b1_ref, wqkvs_ref, bqkvs_ref, o_ref):
    """h = relu(anorm_tile @ (x@W1) + b1); o = h @ [Wq|Wk|Wv|Wskip] + biases."""
    f32 = jnp.float32
    h = jnp.dot(an_ref[...], xw_ref[...], preferred_element_type=f32) + b1_ref[...]
    h = jnp.maximum(h, 0.0)
    qkvs = (jnp.dot(h.astype(jnp.bfloat16), wqkvs_ref[...],
                    preferred_element_type=f32) + bqkvs_ref[...])
    o_ref[...] = qkvs.astype(o_ref.dtype)


def _attn_kernel(an_ref, kv_ref, w2_ref, o_ref, *, tm, hidden, seg):
    """TransformerConv(heads=1) for one row tile, fused with t @ W2.

    This tile's q/skip rows are read from the resident qkvs copy (kv_ref)
    rather than streamed again as a separate row-tiled input."""
    f32, bf16 = jnp.float32, jnp.bfloat16
    i = pl.program_id(0)
    n = an_ref.shape[1]

    row0 = pl.multiple_of(i * tm, tm)
    qt = kv_ref[pl.ds(row0, tm), :]               # [tm, 4*seg], lane-aligned
    q = qt[:, 0:seg]
    skip = qt[:, 3 * seg:4 * seg].astype(f32)
    k = kv_ref[:, seg:2 * seg]
    v = kv_ref[:, 2 * seg:3 * seg]

    scale = 1.0 / (float(hidden) ** 0.5)
    scores = lax.dot_general(q, k, (((1,), (1,)), ((), ())),
                             preferred_element_type=f32) * scale

    rows = i * tm + lax.broadcasted_iota(jnp.int32, (tm, n), 0)
    cols = lax.broadcasted_iota(jnp.int32, (tm, n), 1)
    mask = jnp.logical_and(an_ref[...] > 0, rows != cols)
    scores = jnp.where(mask, scores, jnp.asarray(-1e30, f32))
    row_max = jnp.max(scores, axis=-1, keepdims=True)
    p = jnp.exp(scores - row_max)
    p = jnp.where(mask, p, 0.0)
    denom = jnp.sum(p, axis=-1, keepdims=True)
    p = p * pl.reciprocal(jnp.maximum(denom, jnp.asarray(1e-30, f32)), approx=True)

    attn = jnp.dot(p.astype(bf16), v, preferred_element_type=f32)
    t = attn + skip
    o_ref[...] = jnp.dot(t.astype(bf16), w2_ref[...],
                         preferred_element_type=f32).astype(o_ref.dtype)


def _gcn2_kernel(an_ref, tw_ref, b2_ref, o_ref):
    """o = anorm_tile @ (t@W2) + b2."""
    y = jnp.dot(an_ref[...], tw_ref[...], preferred_element_type=jnp.float32)
    o_ref[...] = (y + b2_ref[...]).astype(o_ref.dtype)


# ------------------------- once-per-graph / per-model prep -------------------
def prepare_graph(anorm, n_pad=None):
    """Pad + cast the GCN-normalized adjacency once per graph (hoisted out of
    the per-call forward so the N^2 f32->bf16 rewrite is not paid every step)."""
    n = anorm.shape[0]
    if n_pad is None:
        n_pad = _round_up(n, 128)
    an_p = jnp.zeros((n_pad, n_pad), jnp.bfloat16)
    return an_p.at[:n, :n].set(anorm.astype(jnp.bfloat16))


def prepare_params(params):
    """Fuse + lane-pad the weights once per model.  q/k/v/skip each occupy a
    128-lane-aligned segment of the fused projection so in-kernel column
    slices are true views (no masked vreg copies)."""
    f32, bf16 = jnp.float32, jnp.bfloat16
    hidden = params["w1"].shape[1]
    assert hidden == HIDDEN
    f_out = params["w2"].shape[1]
    f_pad = _round_up(f_out, 128)

    w_qkvs = jnp.zeros((hidden, 4 * SEG), f32)
    b_qkvs = jnp.zeros((1, 4 * SEG), f32)
    for s, (w, b) in enumerate([(params["wq"], params["bq"]),
                                (params["wk"], params["bk"]),
                                (params["wv"], params["bv"]),
                                (params["wskip"], params["bskip"])]):
        w_qkvs = w_qkvs.at[:, s * SEG:s * SEG + hidden].set(w)
        b_qkvs = b_qkvs.at[:, s * SEG:s * SEG + hidden].set(b)

    w2 = jnp.zeros((SEG, f_pad), f32).at[:hidden, :f_out].set(params["w2"])
    b2 = jnp.zeros((1, f_pad), f32).at[:, :f_out].set(params["b2"])

    return {
        "w1": params["w1"].astype(f32),
        "b1": params["b1"].astype(f32),
        "w_qkvs": w_qkvs.astype(bf16),
        "b_qkvs": b_qkvs,
        "w2": w2.astype(bf16),
        "b2": b2,
    }


# ------------------------------ JAX forward pass ------------------------------
@functools.partial(jax.jit, static_argnames=("f_out",))
def graph_transformer_forward(x, an_p, prepped, *, f_out):
    """`an_p` from prepare_graph, `prepped` from prepare_params;
    f_out is the true (unpadded) output width."""
    f32, bf16 = jnp.float32, jnp.bfloat16
    n, f_in = x.shape
    n_pad = an_p.shape[0]
    hidden = prepped["w1"].shape[1]
    f_pad = prepped["w2"].shape[1]

    # x @ W1 is a negligible matmul with a 64-lane output -> plain XLA dot in
    # the wrapper instead of a (masked-store) pallas_call.
    x_p = jnp.zeros((n_pad, f_in), f32).at[:n, :].set(x.astype(f32))
    xw1 = jnp.dot(x_p, prepped["w1"], preferred_element_type=f32).astype(bf16)

    vmem_limit = _vmem_limit_bytes()

    if n_pad <= _fused_max_rows():
        # ------------- small-graph fast path: one kernel, grid=(1,) ---------
        flops = (2 * n_pad * n_pad * (hidden + 2 * SEG + f_pad)
                 + 2 * n_pad * hidden * 4 * SEG + 2 * n_pad * SEG * f_pad)
        y_pad = pl.pallas_call(
            functools.partial(_fused_kernel, hidden=hidden, seg=SEG),
            out_shape=jax.ShapeDtypeStruct((n_pad, f_pad), f32),
            grid=(1,),
            in_specs=[
                _full_spec((n_pad, n_pad)),          # anorm (bf16, resident)
                _full_spec((n_pad, hidden)),         # x @ W1
                _full_spec((1, hidden)),             # b1
                _full_spec((hidden, 4 * SEG)),       # [Wq|Wk|Wv|Wskip] padded
                _full_spec((1, 4 * SEG)),            # fused biases
                _full_spec((SEG, f_pad)),            # W2 (lane padded)
                _full_spec((1, f_pad)),              # b2
            ],
            out_specs=_full_spec((n_pad, f_pad)),
            compiler_params=pltpu.CompilerParams(
                dimension_semantics=("arbitrary",),
                vmem_limit_bytes=vmem_limit),
            cost_estimate=pl.CostEstimate(
                flops=flops,
                transcendentals=n_pad * n_pad + n_pad,
                bytes_accessed=2 * n_pad * n_pad
                + 2 * n_pad * (hidden + 4 * SEG) + 4 * n_pad * f_pad),
        )(an_p, xw1, prepped["b1"], prepped["w_qkvs"], prepped["b_qkvs"],
          prepped["w2"], prepped["b2"])
        return y_pad[:n, :f_out]

    # -------------------- large-graph row-tiled pipelined path --------------
    # TODO(synk): for very large N add a second 'arbitrary' grid axis over the
    # key/column dimension (flash-style online softmax + K-accumulation) so no
    # full-N operand stays VMEM-resident; also consider an fp8 anorm (v7x) or
    # a bit-packed neighbor mask to cut the dominant anorm HBM stream.
    tm = _pick_row_tile(n_pad, f_pad)
    grid = (n_pad // tm,)
    cparams = pltpu.CompilerParams(
        dimension_semantics=("parallel",),
        vmem_limit_bytes=vmem_limit)

    # ---- 1) GCN1 + ReLU + fused QKV/skip projection ----
    qkvs = pl.pallas_call(
        _gcn_qkvs_kernel,
        out_shape=jax.ShapeDtypeStruct((n_pad, 4 * SEG), bf16),
        grid=grid,
        in_specs=[
            _row_spec(tm, n_pad),                    # anorm row slab (streamed)
            _resident_spec((n_pad, hidden)),         # x@W1 (single-buffered)
            _resident_spec((1, hidden)),
            _resident_spec((hidden, 4 * SEG)),
            _resident_spec((1, 4 * SEG)),
        ],
        out_specs=_row_spec(tm, 4 * SEG),
        compiler_params=cparams,
        cost_estimate=pl.CostEstimate(
            flops=2 * n_pad * n_pad * hidden + 8 * n_pad * hidden * SEG,
            transcendentals=0,
            bytes_accessed=2 * n_pad * n_pad + 2 * n_pad * hidden
            + 2 * n_pad * 4 * SEG),
    )(an_p, xw1, prepped["b1"], prepped["w_qkvs"], prepped["b_qkvs"])

    # ---- 2) TransformerConv attention (+ skip) fused with t @ W2 ----
    tw2 = pl.pallas_call(
        functools.partial(_attn_kernel, tm=tm, hidden=hidden, seg=SEG),
        out_shape=jax.ShapeDtypeStruct((n_pad, f_pad), bf16),
        grid=grid,
        in_specs=[
            _row_spec(tm, n_pad),                    # anorm row slab -> mask
            _resident_spec((n_pad, 4 * SEG)),        # all q/k/v/skip (resident)
            _resident_spec((SEG, f_pad)),            # W2 (lane padded)
        ],
        out_specs=_row_spec(tm, f_pad),
        compiler_params=cparams,
        cost_estimate=pl.CostEstimate(
            flops=4 * n_pad * n_pad * SEG + 2 * n_pad * SEG * f_pad,
            transcendentals=n_pad * n_pad,
            bytes_accessed=2 * n_pad * n_pad + 2 * n_pad * 4 * SEG
            + 2 * n_pad * f_pad),
    )(an_p, qkvs, prepped["w2"])

    # ---- 3) GCN2 propagation + bias ----
    y_pad = pl.pallas_call(
        _gcn2_kernel,
        out_shape=jax.ShapeDtypeStruct((n_pad, f_pad), f32),
        grid=grid,
        in_specs=[
            _row_spec(tm, n_pad),                    # anorm row slab (streamed)
            _resident_spec((n_pad, f_pad)),          # t@W2 (single-buffered)
            _resident_spec((1, f_pad)),
        ],
        out_specs=_row_spec(tm, f_pad),
        compiler_params=cparams,
        cost_estimate=pl.CostEstimate(
            flops=2 * n_pad * n_pad * f_pad,
            transcendentals=0,
            bytes_accessed=2 * n_pad * n_pad + 2 * n_pad * f_pad
            + 4 * n_pad * f_pad),
    )(an_p, tw2, prepped["b2"])

    return y_pad[:n, :f_out]


# --------------------------- graph preprocessing -----------------------------
def build_dense_graph(edge_index, num_nodes):
    """edge_index: [2, E] int32.  Returns the GCN-normalized dense adjacency
    D^-1/2 (A+I) D^-1/2 (undirected).  The attention neighbor mask is derived
    from it inside the kernel, so no separate mask array is materialized."""
    src, dst = edge_index[0], edge_index[1]
    a = jnp.zeros((num_nodes, num_nodes), jnp.float32)
    a = a.at[dst, src].set(1.0)
    a = a.at[src, dst].set(1.0)                              # undirected graph
    a = a * (1.0 - jnp.eye(num_nodes, dtype=jnp.float32))    # drop self edges
    a_hat = a + jnp.eye(num_nodes, dtype=jnp.float32)        # GCN self-loops
    deg = jnp.sum(a_hat, axis=-1)
    d_inv_sqrt = 1.0 / jnp.sqrt(deg)
    return d_inv_sqrt[:, None] * a_hat * d_inv_sqrt[None, :]


def init_params(key, in_channels, hidden, out_channels):
    keys = jax.random.split(key, 7)
    scale = 0.1
    return {
        "w1": scale * jax.random.normal(keys[0], (in_channels, hidden), jnp.float32),
        "b1": jnp.zeros((1, hidden), jnp.float32),
        "wq": scale * jax.random.normal(keys[1], (hidden, hidden), jnp.float32),
        "bq": jnp.full((1, hidden), 0.01, jnp.float32),
        "wk": scale * jax.random.normal(keys[2], (hidden, hidden), jnp.float32),
        "bk": jnp.full((1, hidden), -0.01, jnp.float32),
        "wv": scale * jax.random.normal(keys[3], (hidden, hidden), jnp.float32),
        "bv": jnp.zeros((1, hidden), jnp.float32),
        "wskip": scale * jax.random.normal(keys[4], (hidden, hidden), jnp.float32),
        "bskip": jnp.zeros((1, hidden), jnp.float32),
        "w2": scale * jax.random.normal(keys[5], (hidden, out_channels), jnp.float32),
        "b2": jnp.full((1, out_channels), 0.02, jnp.float32),
    }


# ------------------------------- example run ---------------------------------
if __name__ == "__main__":
    key = jax.random.PRNGKey(0)
    num_nodes = 48        # small graph -> fused single-kernel fast path
    in_channels = 32      # stand-in for feature_dim (256 in the original CSV)
    out_channels = 32     # out_channels == in_channels in the original module
    hidden = HIDDEN

    # deterministic ring + chord graph (edge_index shaped like PyG: [2, E])
    src = jnp.arange(num_nodes, dtype=jnp.int32)
    dst = (src + 1) % num_nodes
    chord_src = jnp.arange(0, num_nodes, 4, dtype=jnp.int32)
    chord_dst = (chord_src + 7) % num_nodes
    edge_index = jnp.stack(
        [jnp.concatenate([src, chord_src]), jnp.concatenate([dst, chord_dst])], axis=0
    )

    k_x, k_p = jax.random.split(key)
    x = jax.random.normal(k_x, (num_nodes, in_channels), jnp.float32)
    params = init_params(k_p, in_channels, hidden, out_channels)

    anorm = build_dense_graph(edge_index, num_nodes)
    an_p = prepare_graph(anorm)          # pad + bf16-cast once per graph
    prepped = prepare_params(params)     # fuse + lane-pad weights once per model

    y = graph_transformer_forward(x, an_p, prepped, f_out=out_channels)
    y = jax.block_until_ready(y)

    assert y.shape == (num_nodes, out_channels)
    assert bool(jnp.all(jnp.isfinite(y)))
    print("KERNEL_OK")
</pallas_src>

<mosaic_0001>
module attributes {stable_mosaic.version = 11 : i64} {
  func.func @_fused_kernel(%arg0: i32, %arg1: memref<128x128xbf16, #tpu.memory_space<vmem>>, %arg2: memref<128x64xbf16, #tpu.memory_space<vmem>>, %arg3: memref<1x64xf32, #tpu.memory_space<vmem>>, %arg4: memref<64x512xbf16, #tpu.memory_space<vmem>>, %arg5: memref<1x512xf32, #tpu.memory_space<vmem>>, %arg6: memref<128x128xbf16, #tpu.memory_space<vmem>>, %arg7: memref<1x128xf32, #tpu.memory_space<vmem>>, %arg8: memref<128x128xf32, #tpu.memory_space<vmem>>) attributes {dimension_semantics = [#tpu.dimension_semantics<arbitrary>], iteration_bounds = array<i64: 1>, scalar_prefetch = 0 : i64, scratch_operands = 0 : i64, tpu.core_type = #tpu.core_type<tc>, window_params = [{pipeline_mode = #tpu.pipeline_mode<synchronous>, transform_indices = @transform_0, window_bounds = array<i64: 128, 128>}, {pipeline_mode = #tpu.pipeline_mode<synchronous>, transform_indices = @transform_1, window_bounds = array<i64: 128, 64>}, {pipeline_mode = #tpu.pipeline_mode<synchronous>, transform_indices = @transform_2, window_bounds = array<i64: 1, 64>}, {pipeline_mode = #tpu.pipeline_mode<synchronous>, transform_indices = @transform_3, window_bounds = array<i64: 64, 512>}, {pipeline_mode = #tpu.pipeline_mode<synchronous>, transform_indices = @transform_4, window_bounds = array<i64: 1, 512>}, {pipeline_mode = #tpu.pipeline_mode<synchronous>, transform_indices = @transform_5, window_bounds = array<i64: 128, 128>}, {pipeline_mode = #tpu.pipeline_mode<synchronous>, transform_indices = @transform_6, window_bounds = array<i64: 1, 128>}, {pipeline_mode = #tpu.pipeline_mode<synchronous>, transform_indices = @transform_7, window_bounds = array<i64: 128, 128>}]} {
    %c0 = arith.constant 0 : index
    %c0_0 = arith.constant 0 : index
    %0 = vector.load %arg1[%c0, %c0_0] : memref<128x128xbf16, #tpu.memory_space<vmem>>, vector<128x128xbf16>
    %c0_1 = arith.constant 0 : index
    %c0_2 = arith.constant 0 : index
    %1 = vector.load %arg2[%c0_1, %c0_2] : memref<128x64xbf16, #tpu.memory_space<vmem>>, vector<128x64xbf16>
    %cst = arith.constant dense<0.000000e+00> : vector<128x64xf32>
    %2 = tpu.matmul %0, %1, %cst {dimension_numbers = #tpu.dot_dimension_numbers<[1], [0], [0], [1], [0, 0, 1, 1], [], []>} : vector<128x128xbf16>, vector<128x64xbf16>, vector<128x64xf32> -> vector<128x64xf32>
    %c0_3 = arith.constant 0 : index
    %c0_4 = arith.constant 0 : index
    %3 = vector.load %arg3[%c0_3, %c0_4] : memref<1x64xf32, #tpu.memory_space<vmem>>, vector<1x64xf32>
    %4 = vector.broadcast %3 : vector<1x64xf32> to vector<128x64xf32>
    %5 = arith.addf %2, %4 : vector<128x64xf32>
    %cst_5 = arith.constant 0.000000e+00 : f32
    %6 = vector.broadcast %cst_5 : f32 to vector<128x64xf32>
    %7 = arith.maximumf %5, %6 : vector<128x64xf32>
    %8 = arith.truncf %7 : vector<128x64xf32> to vector<128x64xbf16>
    %c0_6 = arith.constant 0 : index
    %c0_7 = arith.constant 0 : index
    %9 = vector.load %arg4[%c0_6, %c0_7] : memref<64x512xbf16, #tpu.memory_space<vmem>>, vector<64x512xbf16>
    %cst_8 = arith.constant dense<0.000000e+00> : vector<128x512xf32>
    %10 = tpu.matmul %8, %9, %cst_8 {dimension_numbers = #tpu.dot_dimension_numbers<[1], [0], [0], [1], [0, 0, 1, 1], [], []>} : vector<128x64xbf16>, vector<64x512xbf16>, vector<128x512xf32> -> vector<128x512xf32>
    %c0_9 = arith.constant 0 : index
    %c0_10 = arith.constant 0 : index
    %11 = vector.load %arg5[%c0_9, %c0_10] : memref<1x512xf32, #tpu.memory_space<vmem>>, vector<1x512xf32>
    %12 = vector.broadcast %11 : vector<1x512xf32> to vector<128x512xf32>
    %13 = arith.addf %10, %12 : vector<128x512xf32>
    %14 = vector.extract_strided_slice %13 {offsets = [0, 0], sizes = [128, 128], strides = [1, 1]} : vector<128x512xf32> to vector<128x128xf32>
    %15 = vector.extract_strided_slice %13 {offsets = [0, 128], sizes = [128, 128], strides = [1, 1]} : vector<128x512xf32> to vector<128x128xf32>
    %16 = vector.extract_strided_slice %13 {offsets = [0, 256], sizes = [128, 128], strides = [1, 1]} : vector<128x512xf32> to vector<128x128xf32>
    %17 = vector.extract_strided_slice %13 {offsets = [0, 384], sizes = [128, 128], strides = [1, 1]} : vector<128x512xf32> to vector<128x128xf32>
    %18 = arith.truncf %14 : vector<128x128xf32> to vector<128x128xbf16>
    %19 = arith.truncf %15 : vector<128x128xf32> to vector<128x128xbf16>
    %cst_11 = arith.constant dense<0.000000e+00> : vector<128x128xf32>
    %20 = tpu.matmul %18, %19, %cst_11 {dimension_numbers = #tpu.dot_dimension_numbers<[1], [1], [0], [0], [0, 0, 1, 0], [], []>} : vector<128x128xbf16>, vector<128x128xbf16>, vector<128x128xf32> -> vector<128x128xf32>
    %cst_12 = arith.constant 1.250000e-01 : f32
    %21 = vector.broadcast %cst_12 : f32 to vector<128x128xf32>
    %22 = arith.mulf %20, %21 : vector<128x128xf32>
    %23 = tpu.iota {dimensions = array<i32: 0>} : vector<128x128xi32>
    %24 = tpu.iota {dimensions = array<i32: 1>} : vector<128x128xi32>
    %cst_13 = arith.constant 0.000000e+00 : bf16
    %25 = vector.broadcast %cst_13 : bf16 to vector<128x128xbf16>
    %26 = arith.cmpf ogt, %0, %25 : vector<128x128xbf16>
    %27 = arith.cmpi ne, %23, %24 : vector<128x128xi32>
    %28 = arith.andi %26, %27 : vector<128x128xi1>
    %cst_14 = arith.constant -1.000000e+30 : f32
    %29 = vector.broadcast %cst_14 : f32 to vector<128x128xf32>
    %30 = arith.select %28, %22, %29 : vector<128x128xi1>, vector<128x128xf32>
    %cst_15 = arith.constant dense<0xFF800000> : vector<128xf32>
    %31 = vector.multi_reduction <maximumf>, %30, %cst_15 [1] : vector<128x128xf32> to vector<128xf32>
    %32 = vector.shape_cast %31 : vector<128xf32> to vector<128x1xf32>
    %33 = vector.broadcast %32 : vector<128x1xf32> to vector<128x128xf32>
    %34 = arith.subf %30, %33 : vector<128x128xf32>
    %35 = math.exp %34 : vector<128x128xf32>
    %cst_16 = arith.constant 0.000000e+00 : f32
    %36 = vector.broadcast %cst_16 : f32 to vector<128x128xf32>
    %37 = arith.select %28, %35, %36 : vector<128x128xi1>, vector<128x128xf32>
    %cst_17 = arith.constant dense<0.000000e+00> : vector<128xf32>
    %38 = vector.multi_reduction <add>, %37, %cst_17 [1] : vector<128x128xf32> to vector<128xf32>
    %39 = vector.shape_cast %38 : vector<128xf32> to vector<128x1xf32>
    %cst_18 = arith.constant 1.000000e-30 : f32
    %40 = vector.broadcast %cst_18 : f32 to vector<128x1xf32>
    %41 = arith.maximumf %39, %40 : vector<128x1xf32>
    %42 = tpu.reciprocal %41 {approx = true} : vector<128x1xf32> -> vector<128x1xf32>
    %43 = vector.broadcast %42 : vector<128x1xf32> to vector<128x128xf32>
    %44 = arith.mulf %37, %43 : vector<128x128xf32>
    %45 = arith.truncf %44 : vector<128x128xf32> to vector<128x128xbf16>
    %46 = arith.truncf %16 : vector<128x128xf32> to vector<128x128xbf16>
    %cst_19 = arith.constant dense<0.000000e+00> : vector<128x128xf32>
    %47 = tpu.matmul %45, %46, %cst_19 {dimension_numbers = #tpu.dot_dimension_numbers<[1], [0], [0], [1], [0, 0, 1, 1], [], []>} : vector<128x128xbf16>, vector<128x128xbf16>, vector<128x128xf32> -> vector<128x128xf32>
    %48 = arith.addf %47, %17 : vector<128x128xf32>
    %49 = arith.truncf %48 : vector<128x128xf32> to vector<128x128xbf16>
    %c0_20 = arith.constant 0 : index
    %c0_21 = arith.constant 0 : index
    %50 = vector.load %arg6[%c0_20, %c0_21] : memref<128x128xbf16, #tpu.memory_space<vmem>>, vector<128x128xbf16>
    %cst_22 = arith.constant dense<0.000000e+00> : vector<128x128xf32>
    %51 = tpu.matmul %49, %50, %cst_22 {dimension_numbers = #tpu.dot_dimension_numbers<[1], [0], [0], [1], [0, 0, 1, 1], [], []>} : vector<128x128xbf16>, vector<128x128xbf16>, vector<128x128xf32> -> vector<128x128xf32>
    %52 = arith.truncf %51 : vector<128x128xf32> to vector<128x128xbf16>
    %cst_23 = arith.constant dense<0.000000e+00> : vector<128x128xf32>
    %53 = tpu.matmul %0, %52, %cst_23 {dimension_numbers = #tpu.dot_dimension_numbers<[1], [0], [0], [1], [0, 0, 1, 1], [], []>} : vector<128x128xbf16>, vector<128x128xbf16>, vector<128x128xf32> -> vector<128x128xf32>
    %c0_24 = arith.constant 0 : index
    %c0_25 = arith.constant 0 : index
    %54 = vector.load %arg7[%c0_24, %c0_25] : memref<1x128xf32, #tpu.memory_space<vmem>>, vector<1x128xf32>
    %55 = vector.broadcast %54 : vector<1x128xf32> to vector<128x128xf32>
    %56 = arith.addf %53, %55 : vector<128x128xf32>
    %c0_26 = arith.constant 0 : index
    %c0_27 = arith.constant 0 : index
    %57 = vector.load %arg8[%c0_26, %c0_27] : memref<128x128xf32, #tpu.memory_space<vmem>>, vector<128x128xf32>
    tpu.vector_store %arg8[%c0_26, %c0_27], %56 {strides = array<i32>} : memref<128x128xf32, #tpu.memory_space<vmem>>, vector<128x128xf32>,
    return
  }
  func.func @transform_0(%arg0: i32) -> (i32, i32) {
    %c0_i32 = arith.constant 0 : i32
    %c0_i32_0 = arith.constant 0 : i32
    %c0_i32_1 = arith.constant 0 : i32
    return %c0_i32, %c0_i32_0 : i32, i32
  }
  func.func @transform_1(%arg0: i32) -> (i32, i32) {
    %c0_i32 = arith.constant 0 : i32
    %c0_i32_0 = arith.constant 0 : i32
    %c0_i32_1 = arith.constant 0 : i32
    return %c0_i32, %c0_i32_0 : i32, i32
  }
  func.func @transform_2(%arg0: i32) -> (i32, i32) {
    %c0_i32 = arith.constant 0 : i32
    %c0_i32_0 = arith.constant 0 : i32
    %c0_i32_1 = arith.constant 0 : i32
    return %c0_i32, %c0_i32_0 : i32, i32
  }
  func.func @transform_3(%arg0: i32) -> (i32, i32) {
    %c0_i32 = arith.constant 0 : i32
    %c0_i32_0 = arith.constant 0 : i32
    %c0_i32_1 = arith.constant 0 : i32
    return %c0_i32, %c0_i32_0 : i32, i32
  }
  func.func @transform_4(%arg0: i32) -> (i32, i32) {
    %c0_i32 = arith.constant 0 : i32
    %c0_i32_0 = arith.constant 0 : i32
    %c0_i32_1 = arith.constant 0 : i32
    return %c0_i32, %c0_i32_0 : i32, i32
  }
  func.func @transform_5(%arg0: i32) -> (i32, i32) {
    %c0_i32 = arith.constant 0 : i32
    %c0_i32_0 = arith.constant 0 : i32
    %c0_i32_1 = arith.constant 0 : i32
    return %c0_i32, %c0_i32_0 : i32, i32
  }
  func.func @transform_6(%arg0: i32) -> (i32, i32) {
    %c0_i32 = arith.constant 0 : i32
    %c0_i32_0 = arith.constant 0 : i32
    %c0_i32_1 = arith.constant 0 : i32
    return %c0_i32, %c0_i32_0 : i32, i32
  }
  func.func @transform_7(%arg0: i32) -> (i32, i32) {
    %c0_i32 = arith.constant 0 : i32
    %c0_i32_0 = arith.constant 0 : i32
    %c0_i32_1 = arith.constant 0 : i32
    return %c0_i32, %c0_i32_0 : i32, i32
  }
}

</mosaic_0001>

<llo_original>
// kernel: graph_transformer_forward.1
$region0: #{graph_transformer_forward.1}
  #allocation0 [shape = 'u32[]', space=smem, size = 0x4, offset = 0x4, fixed_abs, tag = 'smem constant byte address 0x4 - core index']
  #allocation1 [shape = 'u32[144,128]{1,0:T(1,128)}', space=vmem, size = 0x12000, scoped, tag = 'internal scratch']
  %s0 = inlined_call_operand.vmem [shape: bf16[128,128], index: 0, kind: input, shape index: {}]
  %s1 = inlined_call_operand.vmem [shape: bf16[128,64], index: 1, kind: input, shape index: {}]
  %s2 = inlined_call_operand.vmem [shape: f32[1,64], index: 2, kind: input, shape index: {}]
  %s3 = inlined_call_operand.vmem [shape: bf16[64,512], index: 3, kind: input, shape index: {}]
  %s4 = inlined_call_operand.vmem [shape: f32[1,512], index: 4, kind: input, shape index: {}]
  %s5 = inlined_call_operand.hbm [shape: bf16[128,128], index: 5, kind: input, shape index: {}]
  %s6 = inlined_call_operand.vmem [shape: f32[1,128], index: 6, kind: input, shape index: {}]
  %s7 = inlined_call_operand.vmem [shape: f32[128,128], index: 7, kind: output, shape index: {}]
  %s8 = sld [smem:[#allocation0]]
  $region42: #{graph_transformer_forward.1} parent=0
    _
  %s10 = ssub.s32 1, %s8
  %s11 = scalar_select 0, %s10, %s8
  $region1: #{graph_transformer_forward.1} parent=0
    #allocation2 [shape = 'u8[32768]{0}', space=vmem, size = 0x8000, scoped, tag = 'input window, operand 5, single buffered']
    #allocation3 [shape = 's32[1]{0}', space=sflag, size = 0x4, scoped, tag = 'scoped memory for graph_transformer_forward.1']
    %12 = vsyncpa [#allocation3], 0
    // Predicated region
    $region2: #{graph_transformer_forward.1} parent=1 // pred_check
      _
    $region3: #{graph_transformer_forward.1} parent=1 // pred_check_branch
      %14 = sbr.rel (0) target = $region5
    $region4: #{graph_transformer_forward.1} parent=1 // pred_region
      _
    $region5: #{graph_transformer_forward.1} parent=1 // pred_fallthru
      _
    // Predicated region
    $region6: #{graph_transformer_forward.1} parent=1 // pred_check
      _
    $region7: #{graph_transformer_forward.1} parent=1 // pred_check_branch
      %16 = sbr.rel (0) target = $region9
    $region8: #{graph_transformer_forward.1} parent=1 // pred_region
      _
    $region9: #{graph_transformer_forward.1} parent=1 // pred_fallthru
      _
    // Predicated region
    $region10: #{graph_transformer_forward.1} parent=1 // pred_check
      _
    $region11: #{graph_transformer_forward.1} parent=1 // pred_check_branch
      %18 = sbr.rel (0) target = $region13
    $region12: #{graph_transformer_forward.1} parent=1 // pred_region
      _
    $region13: #{graph_transformer_forward.1} parent=1 // pred_fallthru
      _
    // Predicated region
    $region14: #{graph_transformer_forward.1} parent=1 // pred_check
      _
    $region15: #{graph_transformer_forward.1} parent=1 // pred_check_branch
      %20 = sbr.rel (0) target = $region17
    $region16: #{graph_transformer_forward.1} parent=1 // pred_region
      _
    $region17: #{graph_transformer_forward.1} parent=1 // pred_fallthru
      _
    // Predicated region
    $region18: #{graph_transformer_forward.1} parent=1 // pred_check
      _
    $region19: #{graph_transformer_forward.1} parent=1 // pred_check_branch
      %22 = sbr.rel (0) target = $region21
    $region20: #{graph_transformer_forward.1} parent=1 // pred_region
      _
    $region21: #{graph_transformer_forward.1} parent=1 // pred_fallthru
      _
    // Predicated region
    $region22: #{graph_transformer_forward.1} parent=1 // pred_check
      _
    $region23: #{graph_transformer_forward.1} parent=1 // pred_check_branch
      %24 = sbr.rel (0) target = $region25
    $region24: #{graph_transformer_forward.1} parent=1 // pred_region
      %s26 = ssub.s32 1024, 1024
      %27 = vsyncadd [#allocation3], %s26
      %s28 = sshll.u32 [#allocation2], 4
      %s29 = int_to_ptr.vmem [resolvable:$true] %s28
      %34 = dma.hbm_to_vmem [thread:$0]  %s5, 1024, %s29, [#allocation3], 64, 64, 4
    $region25: #{graph_transformer_forward.1} parent=1 // pred_fallthru
      _
    // Predicated region
    $region26: #{graph_transformer_forward.1} parent=1 // pred_check
      _
    $region27: #{graph_transformer_forward.1} parent=1 // pred_check_branch
      %36 = sbr.rel (0) target = $region29
    $region28: #{graph_transformer_forward.1} parent=1 // pred_region
      _
    $region29: #{graph_transformer_forward.1} parent=1 // pred_fallthru
      _
    // Predicated region
    $region30: #{graph_transformer_forward.1} parent=1 // pred_check
      _
    $region31: #{graph_transformer_forward.1} parent=1 // pred_check_branch
      %38 = sbr.rel (0) target = $region33
    $region32: #{graph_transformer_forward.1} parent=1 // pred_region
      %39 = dma.done [#allocation3], 1024
    $region33: #{graph_transformer_forward.1} parent=1 // pred_fallthru
      _
    %v43 = vld [vmem:[%s0] sm:$0xf]
    %v44 = vld [vmem:[%s0 + $0x4] sm:$0xf]
    %v45 = vld [vmem:[%s0 + $0x8] sm:$0xf]
    %v46 = vld [vmem:[%s0 + $0xc] sm:$0xf]
    %v47 = vld [vmem:[%s0 + $0x10] sm:$0xf]
    %v48 = vld [vmem:[%s0 + $0x14] sm:$0xf]
    %v49 = vld [vmem:[%s0 + $0x18] sm:$0xf]
    %v50 = vld [vmem:[%s0 + $0x1c] sm:$0xf]
    %v51 = vld [vmem:[%s0 + $0x20] sm:$0xf]
    %v52 = vld [vmem:[%s0 + $0x24] sm:$0xf]
    %v53 = vld [vmem:[%s0 + $0x28] sm:$0xf]
    %v54 = vld [vmem:[%s0 + $0x2c] sm:$0xf]
    %v55 = vld [vmem:[%s0 + $0x30] sm:$0xf]
    %v56 = vld [vmem:[%s0 + $0x34] sm:$0xf]
    %v57 = vld [vmem:[%s0 + $0x38] sm:$0xf]
    %v58 = vld [vmem:[%s0 + $0x3c] sm:$0xf]
    %v59 = vld [vmem:[%s1] sm:$0xf]
    %v60 = vld [vmem:[%s1 + $0x4] sm:$0xf]
    %v61 = vld [vmem:[%s1 + $0x8] sm:$0xf]
    %v62 = vld [vmem:[%s1 + $0xc] sm:$0xf]
    %v63 = vld [vmem:[%s1 + $0x10] sm:$0xf]
    %v64 = vld [vmem:[%s1 + $0x14] sm:$0xf]
    %v65 = vld [vmem:[%s1 + $0x18] sm:$0xf]
    %v66 = vld [vmem:[%s1 + $0x1c] sm:$0xf]
    %v67 = vld [vmem:[%s1 + $0x20] sm:$0xf]
    %v68 = vld [vmem:[%s1 + $0x24] sm:$0xf]
    %v69 = vld [vmem:[%s1 + $0x28] sm:$0xf]
    %v70 = vld [vmem:[%s1 + $0x2c] sm:$0xf]
    %v71 = vld [vmem:[%s1 + $0x30] sm:$0xf]
    %v72 = vld [vmem:[%s1 + $0x34] sm:$0xf]
    %v73 = vld [vmem:[%s1 + $0x38] sm:$0xf]
    %v74 = vld [vmem:[%s1 + $0x3c] sm:$0xf]
    %v75 = vld [vmem:[%s2] sm:$0x1]
    %v77 = vlaneseq
    %v78 = vshrl.u32 %v77, 7
    %v79 = vsub.s32 0, %v78
    %v80 = vrot.slane %v75, %v79
    %v98 = vunpack.c.l.b16 %v43
    %v99 = vunpack.c.l.b16 %v44
    %v100 = vunpack.c.l.b16 %v45
    %v101 = vunpack.c.l.b16 %v46
    %v102 = vunpack.c.l.b16 %v47
    %v103 = vunpack.c.l.b16 %v48
    %v104 = vunpack.c.l.b16 %v49
    %v105 = vunpack.c.l.b16 %v50
    %v106 = vunpack.c.l.b16 %v51
    %v107 = vunpack.c.l.b16 %v52
    %v108 = vunpack.c.l.b16 %v53
    %v109 = vunpack.c.l.b16 %v54
    %v110 = vunpack.c.l.b16 %v55
    %v111 = vunpack.c.l.b16 %v56
    %v112 = vunpack.c.l.b16 %v57
    %v113 = vunpack.c.l.b16 %v58
    %v114 = vpack.c.b16 %v99, %v98
    %v115 = vpack.c.b16 %v101, %v100
    %v116 = vpack.c.b16 %v103, %v102
    %v117 = vpack.c.b16 %v105, %v104
    %v118 = vpack.c.b16 %v107, %v106
    %v119 = vpack.c.b16 %v109, %v108
    %v120 = vpack.c.b16 %v111, %v110
    %v121 = vpack.c.b16 %v113, %v112
    %v146 = vunpack.c.l.b16 %v59
    %v147 = vunpack.c.l.b16 %v60
    %v148 = vunpack.c.l.b16 %v61
    %v149 = vunpack.c.l.b16 %v62
    %v150 = vunpack.c.l.b16 %v63
    %v151 = vunpack.c.l.b16 %v64
    %v152 = vunpack.c.l.b16 %v65
    %v153 = vunpack.c.l.b16 %v66
    %v154 = vunpack.c.l.b16 %v67
    %v155 = vunpack.c.l.b16 %v68
    %v156 = vunpack.c.l.b16 %v69
    %v157 = vunpack.c.l.b16 %v70
    %v158 = vunpack.c.l.b16 %v71
    %v159 = vunpack.c.l.b16 %v72
    %v160 = vunpack.c.l.b16 %v73
    %v161 = vunpack.c.l.b16 %v74
    %v162 = vpack.c.b16 %v147, %v146
    %v163 = vpack.c.b16 %v149, %v148
    %v164 = vpack.c.b16 %v151, %v150
    %v165 = vpack.c.b16 %v153, %v152
    %v166 = vpack.c.b16 %v155, %v154
    %v167 = vpack.c.b16 %v157, %v156
    %v168 = vpack.c.b16 %v159, %v158
    %v169 = vpack.c.b16 %v161, %v160
    %178 = vmatprep.subr.bf16.mxu0 0
    %179 = vmatpush1.bf16.msra.mxu0 %v169
    %180 = vmatprep.subr.bf16.mxu0 0
    %181 = vmatpush1.bf16.msra.mxu0 %v168
    %182 = vmatprep.subr.bf16.mxu0 0
    %183 = vmatpush1.bf16.msra.mxu0 %v167
    %184 = vmatprep.subr.bf16.mxu0 0
    %185 = vmatpush1.bf16.msra.mxu0 %v166
    %186 = vmatprep.subr.bf16.mxu0 0
    %187 = vmatpush1.bf16.msra.mxu0 %v165
    %188 = vmatprep.subr.bf16.mxu0 0
    %189 = vmatpush1.bf16.msra.mxu0 %v164
    %190 = vmatprep.subr.bf16.mxu0 0
    %191 = vmatpush1.bf16.msra.mxu0 %v163
    %192 = vmatprep.subr.bf16.mxu0 0
    %193 = vmatpush1.bf16.msra.mxu0 %v162
    %194 = vmatprep.subr.bf16.mxu0 0
    %195 = vmatpush2.bf16.msra.mxu0 0
    %196 = vmatprep.subr.bf16.mxu0 0
    %197 = vmatpush2.bf16.msra.mxu0 0
    %198 = vmatprep.subr.bf16.mxu0 0
    %199 = vmatpush2.bf16.msra.mxu0 0
    %200 = vmatprep.subr.bf16.mxu0 0
    %201 = vmatpush2.bf16.msra.mxu0 0
    %202 = vmatprep.subr.bf16.mxu0 0
    %203 = vmatpush2.bf16.msra.mxu0 0
    %204 = vmatprep.subr.bf16.mxu0 0
    %205 = vmatpush2.bf16.msra.mxu0 0
    %206 = vmatprep.subr.bf16.mxu0 0
    %207 = vmatpush2.bf16.msra.mxu0 0
    %208 = vmatprep.subr.bf16.mxu0 0
    %209 = vmatpush2.bf16.msra.mxu0 0
    %210 = vmatprep.mubr.bf16.mxu0 0
    %211 = vmatmul.mubr.bf16.gmra.mxu0 %v114
    %v212 = vpop.f32.mrf.mxu0
    %v213 = vadd.f32 %v80, %v212
    %v214 = vpop.f32.mrf.mxu0
    %v215 = vpop.f32.mrf.mxu0
    %v216 = vadd.f32 %v80, %v215
    %v217 = vpop.f32.mrf.mxu0
    %218 = vmatprep.mubr.bf16.mxu0 0
    %219 = vmatmul.mubr.bf16.gmra.mxu0 %v115
    %v220 = vpop.f32.mrf.mxu0
    %v221 = vadd.f32 %v80, %v220
    %v222 = vpop.f32.mrf.mxu0
    %v223 = vpop.f32.mrf.mxu0
    %v224 = vadd.f32 %v80, %v223
    %v225 = vpop.f32.mrf.mxu0
    %226 = vmatprep.mubr.bf16.mxu0 0
    %227 = vmatmul.mubr.bf16.gmra.mxu0 %v116
    %v228 = vpop.f32.mrf.mxu0
    %v229 = vadd.f32 %v80, %v228
    %v230 = vpop.f32.mrf.mxu0
    %v231 = vpop.f32.mrf.mxu0
    %v232 = vadd.f32 %v80, %v231
    %v233 = vpop.f32.mrf.mxu0
    %234 = vmatprep.mubr.bf16.mxu0 0
    %235 = vmatmul.mubr.bf16.gmra.mxu0 %v117
    %v236 = vpop.f32.mrf.mxu0
    %v237 = vadd.f32 %v80, %v236
    %v238 = vpop.f32.mrf.mxu0
    %v239 = vpop.f32.mrf.mxu0
    %v240 = vadd.f32 %v80, %v239
    %v241 = vpop.f32.mrf.mxu0
    %242 = vmatprep.mubr.bf16.mxu0 0
    %243 = vmatmul.mubr.bf16.gmra.mxu0 %v118
    %v244 = vpop.f32.mrf.mxu0
    %v245 = vadd.f32 %v80, %v244
    %v246 = vpop.f32.mrf.mxu0
    %v247 = vpop.f32.mrf.mxu0
    %v248 = vadd.f32 %v80, %v247
    %v249 = vpop.f32.mrf.mxu0
    %250 = vmatprep.mubr.bf16.mxu0 0
    %251 = vmatmul.mubr.bf16.gmra.mxu0 %v119
    %v252 = vpop.f32.mrf.mxu0
    %v253 = vadd.f32 %v80, %v252
    %v254 = vpop.f32.mrf.mxu0
    %v255 = vpop.f32.mrf.mxu0
    %v256 = vadd.f32 %v80, %v255
    %v257 = vpop.f32.mrf.mxu0
    %258 = vmatprep.mubr.bf16.mxu0 0
    %259 = vmatmul.mubr.bf16.gmra.mxu0 %v120
    %v260 = vpop.f32.mrf.mxu0
    %v261 = vadd.f32 %v80, %v260
    %v262 = vpop.f32.mrf.mxu0
    %v263 = vpop.f32.mrf.mxu0
    %v264 = vadd.f32 %v80, %v263
    %v265 = vpop.f32.mrf.mxu0
    %266 = vmatprep.mubr.bf16.mxu0 0
    %267 = vmatmul.mubr.bf16.gmra.mxu0 %v121
    %v268 = vpop.f32.mrf.mxu0
    %v269 = vadd.f32 %v80, %v268
    %v270 = vpop.f32.mrf.mxu0
    %v271 = vpop.f32.mrf.mxu0
    %v272 = vadd.f32 %v80, %v271
    %v273 = vpop.f32.mrf.mxu0
    %274 = vdwg.mxu0
    %v275 = vmax.f32 %v213, 0.0
    %v276 = vmax.f32 %v216, 0.0
    %v277 = vmax.f32 %v221, 0.0
    %v278 = vmax.f32 %v224, 0.0
    %v279 = vmax.f32 %v229, 0.0
    %v280 = vmax.f32 %v232, 0.0
    %v281 = vmax.f32 %v237, 0.0
    %v282 = vmax.f32 %v240, 0.0
    %v283 = vmax.f32 %v245, 0.0
    %v284 = vmax.f32 %v248, 0.0
    %v285 = vmax.f32 %v253, 0.0
    %v286 = vmax.f32 %v256, 0.0
    %v287 = vmax.f32 %v261, 0.0
    %v288 = vmax.f32 %v264, 0.0
    %v289 = vmax.f32 %v269, 0.0
    %v290 = vmax.f32 %v272, 0.0
    %v291 = vpack.c.bf16 %v276, %v275
    %v292 = vpack.c.bf16 %v278, %v277
    %v293 = vpack.c.bf16 %v280, %v279
    %v294 = vpack.c.bf16 %v282, %v281
    %v295 = vpack.c.bf16 %v284, %v283
    %v296 = vpack.c.bf16 %v286, %v285
    %v297 = vpack.c.bf16 %v288, %v287
    %v298 = vpack.c.bf16 %v290, %v289
    %v299 = vld [vmem:[%s3] sm:$0xff]
    %v300 = vld [vmem:[%s3 + $0x8] sm:$0xff]
    %v301 = vld [vmem:[%s3 + $0x10] sm:$0xff]
    %v302 = vld [vmem:[%s3 + $0x18] sm:$0xff]
    %v303 = vld [vmem:[%s3 + $0x20] sm:$0xff]
    %v304 = vld [vmem:[%s3 + $0x28] sm:$0xff]
    %v305 = vld [vmem:[%s3 + $0x30] sm:$0xff]
    %v306 = vld [vmem:[%s3 + $0x38] sm:$0xff]
    %v307 = vld [vmem:[%s3 + $0x40] sm:$0xff]
    %v308 = vld [vmem:[%s3 + $0x48] sm:$0xff]
    %v309 = vld [vmem:[%s3 + $0x50] sm:$0xff]
    %v310 = vld [vmem:[%s3 + $0x58] sm:$0xff]
    %v311 = vld [vmem:[%s3 + $0x60] sm:$0xff]
    %v312 = vld [vmem:[%s3 + $0x68] sm:$0xff]
    %v313 = vld [vmem:[%s3 + $0x70] sm:$0xff]
    %v314 = vld [vmem:[%s3 + $0x78] sm:$0xff]
    %v315 = vld [vmem:[%s4] sm:$0xf]
    %v317 = vlaneseq
    %v318 = vshrl.u32 %v317, 7
    %v319 = vsub.s32 0, %v318
    %v320 = vrot.slane %v315, %v319
    %v321 = vlaneseq
    %v322 = vshrl.u32 %v321, 7
    %v323 = vsub.s32 1, %v322
    %v324 = vrot.slane %v315, %v323
    %v325 = vlaneseq
    %v326 = vshrl.u32 %v325, 7
    %v327 = vsub.s32 2, %v326
    %v328 = vrot.slane %v315, %v327
    %v329 = vlaneseq
    %v330 = vshrl.u32 %v329, 7
    %v331 = vsub.s32 3, %v330
    %v332 = vrot.slane %v315, %v331
    %v353 = vunpack.c.l.b16 %v299
    %v354 = vunpack.c.h.b16 %v299
    %v355 = vunpack.c.l.b16 %v300
    %v356 = vunpack.c.h.b16 %v300
    %v357 = vunpack.c.l.b16 %v301
    %v358 = vunpack.c.h.b16 %v301
    %v359 = vunpack.c.l.b16 %v302
    %v360 = vunpack.c.h.b16 %v302
    %v361 = vunpack.c.l.b16 %v303
    %v362 = vunpack.c.h.b16 %v303
    %v363 = vunpack.c.l.b16 %v304
    %v364 = vunpack.c.h.b16 %v304
    %v365 = vunpack.c.l.b16 %v305
    %v366 = vunpack.c.h.b16 %v305
    %v367 = vunpack.c.l.b16 %v306
    %v368 = vunpack.c.h.b16 %v306
    %v369 = vunpack.c.l.b16 %v307
    %v370 = vunpack.c.h.b16 %v307
    %v371 = vunpack.c.l.b16 %v308
    %v372 = vunpack.c.h.b16 %v308
    %v373 = vunpack.c.l.b16 %v309
    %v374 = vunpack.c.h.b16 %v309
    %v375 = vunpack.c.l.b16 %v310
    %v376 = vunpack.c.h.b16 %v310
    %v377 = vunpack.c.l.b16 %v311
    %v378 = vunpack.c.h.b16 %v311
    %v379 = vunpack.c.l.b16 %v312
    %v380 = vunpack.c.h.b16 %v312
    %v381 = vunpack.c.l.b16 %v313
    %v382 = vunpack.c.h.b16 %v313
    %v383 = vunpack.c.l.b16 %v314
    %v384 = vunpack.c.h.b16 %v314
    %v385 = vpack.c.b16 %v357, %v353
    %v386 = vpack.c.b16 %v358, %v354
    %v387 = vpack.c.b16 %v359, %v355
    %v388 = vpack.c.b16 %v360, %v356
    %v389 = vpack.c.b16 %v365, %v361
    %v390 = vpack.c.b16 %v366, %v362
    %v391 = vpack.c.b16 %v367, %v363
    %v392 = vpack.c.b16 %v368, %v364
    %v393 = vpack.c.b16 %v373, %v369
    %v394 = vpack.c.b16 %v374, %v370
    %v395 = vpack.c.b16 %v375, %v371
    %v396 = vpack.c.b16 %v376, %v372
    %v397 = vpack.c.b16 %v381, %v377
    %v398 = vpack.c.b16 %v382, %v378
    %v399 = vpack.c.b16 %v383, %v379
    %v400 = vpack.c.b16 %v384, %v380
    %vm417 = vcmask 523264
    %v419 = vsel %vm417, %v291, 0
    %v422 = vsel %vm417, %v292, 0
    %v425 = vsel %vm417, %v293, 0
    %v428 = vsel %vm417, %v294, 0
    %v431 = vsel %vm417, %v295, 0
    %v434 = vsel %vm417, %v296, 0
    %v437 = vsel %vm417, %v297, 0
    %v440 = vsel %vm417, %v298, 0
    %442 = vmatprep.subr.bf16.mxu0 0
    %443 = vmatpush1.bf16.msra.mxu0 0
    %444 = vmatprep.subr.bf16.mxu0 0
    %445 = vmatpush1.bf16.msra.mxu0 0
    %446 = vmatprep.subr.bf16.mxu0 0
    %447 = vmatpush1.bf16.msra.mxu0 0
    %448 = vmatprep.subr.bf16.mxu0 0
    %449 = vmatpush1.bf16.msra.mxu0 0
    %450 = vmatprep.subr.bf16.mxu0 %v398
    %451 = vmatpush1.bf16.msra.mxu0 %v397
    %452 = vmatprep.subr.bf16.mxu0 %v394
    %453 = vmatpush1.bf16.msra.mxu0 %v393
    %454 = vmatprep.subr.bf16.mxu0 %v390
    %455 = vmatpush1.bf16.msra.mxu0 %v389
    %456 = vmatprep.subr.bf16.mxu0 %v386
    %457 = vmatpush1.bf16.msra.mxu0 %v385
    %458 = vmatprep.subr.bf16.mxu0 0
    %459 = vmatpush2.bf16.msra.mxu0 0
    %460 = vmatprep.subr.bf16.mxu0 0
    %461 = vmatpush2.bf16.msra.mxu0 0
    %462 = vmatprep.subr.bf16.mxu0 0
    %463 = vmatpush2.bf16.msra.mxu0 0
    %464 = vmatprep.subr.bf16.mxu0 0
    %465 = vmatpush2.bf16.msra.mxu0 0
    %466 = vmatprep.subr.bf16.mxu0 0
    %467 = vmatpush2.bf16.msra.mxu0 0
    %468 = vmatprep.subr.bf16.mxu0 0
    %469 = vmatpush2.bf16.msra.mxu0 0
    %470 = vmatprep.subr.bf16.mxu0 0
    %471 = vmatpush2.bf16.msra.mxu0 0
    %472 = vmatprep.subr.bf16.mxu0 0
    %473 = vmatpush2.bf16.msra.mxu0 0
    %474 = vmatprep.mubr.bf16.mxu0 0
    %475 = vmatmul.mubr.bf16.gmra.mxu0 %v419
    %v476 = vpop.f32.mrf.mxu0
    %v477 = vadd.f32 %v320, %v476
    %v478 = vpop.f32.mrf.mxu0
    %v479 = vadd.f32 %v324, %v478
    %v480 = vpop.f32.mrf.mxu0
    %v481 = vadd.f32 %v320, %v480
    %v482 = vpop.f32.mrf.mxu0
    %v483 = vadd.f32 %v324, %v482
    %484 = vmatprep.mubr.bf16.mxu0 0
    %485 = vmatmul.mubr.bf16.gmra.mxu0 %v422
    %v486 = vpop.f32.mrf.mxu0
    %v487 = vadd.f32 %v320, %v486
    %v488 = vpop.f32.mrf.mxu0
    %v489 = vadd.f32 %v324, %v488
    %v490 = vpop.f32.mrf.mxu0
    %v491 = vadd.f32 %v320, %v490
    %v492 = vpop.f32.mrf.mxu0
    %v493 = vadd.f32 %v324, %v492
    %494 = vmatprep.mubr.bf16.mxu0 0
    %495 = vmatmul.mubr.bf16.gmra.mxu0 %v425
    %v496 = vpop.f32.mrf.mxu0
    %v497 = vadd.f32 %v320, %v496
    %v498 = vpop.f32.mrf.mxu0
    %v499 = vadd.f32 %v324, %v498
    %v500 = vpop.f32.mrf.mxu0
    %v501 = vadd.f32 %v320, %v500
    %v502 = vpop.f32.mrf.mxu0
    %v503 = vadd.f32 %v324, %v502
    %504 = vmatprep.mubr.bf16.mxu0 0
    %505 = vmatmul.mubr.bf16.gmra.mxu0 %v428
    %v506 = vpop.f32.mrf.mxu0
    %v507 = vadd.f32 %v320, %v506
    %v508 = vpop.f32.mrf.mxu0
    %v509 = vadd.f32 %v324, %v508
    %v510 = vpop.f32.mrf.mxu0
    %v511 = vadd.f32 %v320, %v510
    %v512 = vpop.f32.mrf.mxu0
    %v513 = vadd.f32 %v324, %v512
    %514 = vmatprep.mubr.bf16.mxu0 0
    %515 = vmatmul.mubr.bf16.gmra.mxu0 %v431
    %v516 = vpop.f32.mrf.mxu0
    %v517 = vadd.f32 %v320, %v516
    %v518 = vpop.f32.mrf.mxu0
    %v519 = vadd.f32 %v324, %v518
    %v520 = vpop.f32.mrf.mxu0
    %v521 = vadd.f32 %v320, %v520
    %v522 = vpop.f32.mrf.mxu0
    %v523 = vadd.f32 %v324, %v522
    %524 = vmatprep.mubr.bf16.mxu0 0
    %525 = vmatmul.mubr.bf16.gmra.mxu0 %v434
    %v526 = vpop.f32.mrf.mxu0
    %v527 = vadd.f32 %v320, %v526
    %v528 = vpop.f32.mrf.mxu0
    %v529 = vadd.f32 %v324, %v528
    %v530 = vpop.f32.mrf.mxu0
    %v531 = vadd.f32 %v320, %v530
    %v532 = vpop.f32.mrf.mxu0
    %v533 = vadd.f32 %v324, %v532
    %534 = vmatprep.mubr.bf16.mxu0 0
    %535 = vmatmul.mubr.bf16.gmra.mxu0 %v437
    %v536 = vpop.f32.mrf.mxu0
    %v537 = vadd.f32 %v320, %v536
    %v538 = vpop.f32.mrf.mxu0
    %v539 = vadd.f32 %v324, %v538
    %v540 = vpop.f32.mrf.mxu0
    %v541 = vadd.f32 %v320, %v540
    %v542 = vpop.f32.mrf.mxu0
    %v543 = vadd.f32 %v324, %v542
    %544 = vmatprep.mubr.bf16.mxu0 0
    %545 = vmatmul.mubr.bf16.gmra.mxu0 %v440
    %v546 = vpop.f32.mrf.mxu0
    %v547 = vadd.f32 %v320, %v546
    %v548 = vpop.f32.mrf.mxu0
    %v549 = vadd.f32 %v324, %v548
    %v550 = vpop.f32.mrf.mxu0
    %v551 = vadd.f32 %v320, %v550
    %v552 = vpop.f32.mrf.mxu0
    %v553 = vadd.f32 %v324, %v552
    %554 = vdwg.mxu0
    %555 = vmatprep.subr.bf16.mxu0 0
    %556 = vmatpush1.bf16.msra.mxu0 0
    %557 = vmatprep.subr.bf16.mxu0 0
    %558 = vmatpush1.bf16.msra.mxu0 0
    %559 = vmatprep.subr.bf16.mxu0 0
    %560 = vmatpush1.bf16.msra.mxu0 0
    %561 = vmatprep.subr.bf16.mxu0 0
    %562 = vmatpush1.bf16.msra.mxu0 0
    %563 = vmatprep.subr.bf16.mxu0 %v400
    %564 = vmatpush1.bf16.msra.mxu0 %v399
    %565 = vmatprep.subr.bf16.mxu0 %v396
    %566 = vmatpush1.bf16.msra.mxu0 %v395
    %567 = vmatprep.subr.bf16.mxu0 %v392
    %568 = vmatpush1.bf16.msra.mxu0 %v391
    %569 = vmatprep.subr.bf16.mxu0 %v388
    %570 = vmatpush1.bf16.msra.mxu0 %v387
    %571 = vmatprep.subr.bf16.mxu0 0
    %572 = vmatpush2.bf16.msra.mxu0 0
    %573 = vmatprep.subr.bf16.mxu0 0
    %574 = vmatpush2.bf16.msra.mxu0 0
    %575 = vmatprep.subr.bf16.mxu0 0
    %576 = vmatpush2.bf16.msra.mxu0 0
    %577 = vmatprep.subr.bf16.mxu0 0
    %578 = vmatpush2.bf16.msra.mxu0 0
    %579 = vmatprep.subr.bf16.mxu0 0
    %580 = vmatpush2.bf16.msra.mxu0 0
    %581 = vmatprep.subr.bf16.mxu0 0
    %582 = vmatpush2.bf16.msra.mxu0 0
    %583 = vmatprep.subr.bf16.mxu0 0
    %584 = vmatpush2.bf16.msra.mxu0 0
    %585 = vmatprep.subr.bf16.mxu0 0
    %586 = vmatpush2.bf16.msra.mxu0 0
    %587 = vmatprep.mubr.bf16.mxu0 0
    %588 = vmatmul.mubr.bf16.gmra.mxu0 %v419
    %v589 = vpop.f32.mrf.mxu0
    %v590 = vadd.f32 %v328, %v589
    %v591 = vpop.f32.mrf.mxu0
    %v592 = vadd.f32 %v332, %v591
    %v593 = vpop.f32.mrf.mxu0
    %v594 = vadd.f32 %v328, %v593
    %v595 = vpop.f32.mrf.mxu0
    %v596 = vadd.f32 %v332, %v595
    %597 = vmatprep.mubr.bf16.mxu0 0
    %598 = vmatmul.mubr.bf16.gmra.mxu0 %v422
    %v599 = vpop.f32.mrf.mxu0
    %v600 = vadd.f32 %v328, %v599
    %v601 = vpop.f32.mrf.mxu0
    %v602 = vadd.f32 %v332, %v601
    %v603 = vpop.f32.mrf.mxu0
    %v604 = vadd.f32 %v328, %v603
    %v605 = vpop.f32.mrf.mxu0
    %v606 = vadd.f32 %v332, %v605
    %607 = vmatprep.mubr.bf16.mxu0 0
    %608 = vmatmul.mubr.bf16.gmra.mxu0 %v425
    %v609 = vpop.f32.mrf.mxu0
    %v610 = vadd.f32 %v328, %v609
    %v611 = vpop.f32.mrf.mxu0
    %v612 = vadd.f32 %v332, %v611
    %v613 = vpop.f32.mrf.mxu0
    %v614 = vadd.f32 %v328, %v613
    %v615 = vpop.f32.mrf.mxu0
    %v616 = vadd.f32 %v332, %v615
    %617 = vmatprep.mubr.bf16.mxu0 0
    %618 = vmatmul.mubr.bf16.gmra.mxu0 %v428
    %v619 = vpop.f32.mrf.mxu0
    %v620 = vadd.f32 %v328, %v619
    %v621 = vpop.f32.mrf.mxu0
    %v622 = vadd.f32 %v332, %v621
    %v623 = vpop.f32.mrf.mxu0
    %v624 = vadd.f32 %v328, %v623
    %v625 = vpop.f32.mrf.mxu0
    %v626 = vadd.f32 %v332, %v625
    %627 = vmatprep.mubr.bf16.mxu0 0
    %628 = vmatmul.mubr.bf16.gmra.mxu0 %v431
    %v629 = vpop.f32.mrf.mxu0
    %v630 = vadd.f32 %v328, %v629
    %v631 = vpop.f32.mrf.mxu0
    %v632 = vadd.f32 %v332, %v631
    %v633 = vpop.f32.mrf.mxu0
    %v634 = vadd.f32 %v328, %v633
    %v635 = vpop.f32.mrf.mxu0
    %v636 = vadd.f32 %v332, %v635
    %637 = vmatprep.mubr.bf16.mxu0 0
    %638 = vmatmul.mubr.bf16.gmra.mxu0 %v434
    %v639 = vpop.f32.mrf.mxu0
    %v640 = vadd.f32 %v328, %v639
    %v641 = vpop.f32.mrf.mxu0
    %v642 = vadd.f32 %v332, %v641
    %v643 = vpop.f32.mrf.mxu0
    %v644 = vadd.f32 %v328, %v643
    %v645 = vpop.f32.mrf.mxu0
    %v646 = vadd.f32 %v332, %v645
    %647 = vmatprep.mubr.bf16.mxu0 0
    %648 = vmatmul.mubr.bf16.gmra.mxu0 %v437
    %v649 = vpop.f32.mrf.mxu0
    %v650 = vadd.f32 %v328, %v649
    %v651 = vpop.f32.mrf.mxu0
    %v652 = vadd.f32 %v332, %v651
    %v653 = vpop.f32.mrf.mxu0
    %v654 = vadd.f32 %v328, %v653
    %v655 = vpop.f32.mrf.mxu0
    %v656 = vadd.f32 %v332, %v655
    %657 = vmatprep.mubr.bf16.mxu0 0
    %658 = vmatmul.mubr.bf16.gmra.mxu0 %v440
    %v659 = vpop.f32.mrf.mxu0
    %v660 = vadd.f32 %v328, %v659
    %v661 = vpop.f32.mrf.mxu0
    %v662 = vadd.f32 %v332, %v661
    %v663 = vpop.f32.mrf.mxu0
    %v664 = vadd.f32 %v328, %v663
    %v665 = vpop.f32.mrf.mxu0
    %v666 = vadd.f32 %v332, %v665
    %667 = vdwg.mxu0
    %v668 = vpack.c.bf16 %v481, %v477
    %v669 = vpack.c.bf16 %v491, %v487
    %v670 = vpack.c.bf16 %v501, %v497
    %v671 = vpack.c.bf16 %v511, %v507
    %v672 = vpack.c.bf16 %v521, %v517
    %v673 = vpack.c.bf16 %v531, %v527
    %v674 = vpack.c.bf16 %v541, %v537
    %v675 = vpack.c.bf16 %v551, %v547
    %v676 = vpack.c.bf16 %v483, %v479
    %v677 = vpack.c.bf16 %v493, %v489
    %v678 = vpack.c.bf16 %v503, %v499
    %v679 = vpack.c.bf16 %v513, %v509
    %v680 = vpack.c.bf16 %v523, %v519
    %v681 = vpack.c.bf16 %v533, %v529
    %v682 = vpack.c.bf16 %v543, %v539
    %v683 = vpack.c.bf16 %v553, %v549
    %684 = vmatprep.subr.bf16.mxu0 0
    %685 = vmatpush1.bf16.xpose.msra.mxu0 %v683
    %686 = vmatprep.subr.bf16.mxu0 0
    %687 = vmatpush1.bf16.xpose.msra.mxu0 %v682
    %688 = vmatprep.subr.bf16.mxu0 0
    %689 = vmatpush1.bf16.xpose.msra.mxu0 %v681
    %690 = vmatprep.subr.bf16.mxu0 0
    %691 = vmatpush1.bf16.xpose.msra.mxu0 %v680
    %692 = vmatprep.subr.bf16.mxu0 0
    %693 = vmatpush1.bf16.xpose.msra.mxu0 %v679
    %694 = vmatprep.subr.bf16.mxu0 0
    %695 = vmatpush1.bf16.xpose.msra.mxu0 %v678
    %696 = vmatprep.subr.bf16.mxu0 0
    %697 = vmatpush1.bf16.xpose.msra.mxu0 %v677
    %698 = vmatprep.subr.bf16.mxu0 0
    %699 = vmatpush1.bf16.xpose.msra.mxu0 %v676
    %700 = vmatprep.subr.bf16.mxu0 0
    %701 = vmatpush2.bf16.xpose.msra.mxu0 0
    %702 = vmatprep.subr.bf16.mxu0 0
    %703 = vmatpush2.bf16.xpose.msra.mxu0 0
    %704 = vmatprep.subr.bf16.mxu0 0
    %705 = vmatpush2.bf16.xpose.msra.mxu0 0
    %706 = vmatprep.subr.bf16.mxu0 0
    %707 = vmatpush2.bf16.xpose.msra.mxu0 0
    %708 = vmatprep.subr.bf16.mxu0 0
    %709 = vmatpush2.bf16.xpose.msra.mxu0 0
    %710 = vmatprep.subr.bf16.mxu0 0
    %711 = vmatpush2.bf16.xpose.msra.mxu0 0
    %712 = vmatprep.subr.bf16.mxu0 0
    %713 = vmatpush2.bf16.xpose.msra.mxu0 0
    %714 = vmatprep.subr.bf16.mxu0 0
    %715 = vmatpush2.bf16.xpose.msra.mxu0 0
    %716 = vmatprep.mubr.bf16.mxu0 0
    %717 = vmatmul.mubr.bf16.gmra.mxu0 %v668
    %v718 = vpop.f32.mrf.mxu0
    %v719 = vadd.f32 0.0, %v718
    %v720 = vpop.f32.mrf.mxu0
    %v721 = vpop.f32.mrf.mxu0
    %v722 = vadd.f32 0.0, %v721
    %v723 = vpop.f32.mrf.mxu0
    %724 = vmatprep.mubr.bf16.mxu0 0
    %725 = vmatmul.mubr.bf16.gmra.mxu0 %v669
    %v726 = vpop.f32.mrf.mxu0
    %v727 = vadd.f32 0.0, %v726
    %v728 = vpop.f32.mrf.mxu0
    %v729 = vpop.f32.mrf.mxu0
    %v730 = vadd.f32 0.0, %v729
    %v731 = vpop.f32.mrf.mxu0
    %732 = vmatprep.mubr.bf16.mxu0 0
    %733 = vmatmul.mubr.bf16.gmra.mxu0 %v670
    %v734 = vpop.f32.mrf.mxu0
    %v735 = vadd.f32 0.0, %v734
    %v736 = vpop.f32.mrf.mxu0
    %v737 = vpop.f32.mrf.mxu0
    %v738 = vadd.f32 0.0, %v737
    %v739 = vpop.f32.mrf.mxu0
    %740 = vmatprep.mubr.bf16.mxu0 0
    %741 = vmatmul.mubr.bf16.gmra.mxu0 %v671
    %v742 = vpop.f32.mrf.mxu0
    %v743 = vadd.f32 0.0, %v742
    %v744 = vpop.f32.mrf.mxu0
    %v745 = vpop.f32.mrf.mxu0
    %v746 = vadd.f32 0.0, %v745
    %v747 = vpop.f32.mrf.mxu0
    %748 = vmatprep.mubr.bf16.mxu0 0
    %749 = vmatmul.mubr.bf16.gmra.mxu0 %v672
    %v750 = vpop.f32.mrf.mxu0
    %v751 = vadd.f32 0.0, %v750
    %v752 = vpop.f32.mrf.mxu0
    %v753 = vpop.f32.mrf.mxu0
    %v754 = vadd.f32 0.0, %v753
    %v755 = vpop.f32.mrf.mxu0
    %756 = vmatprep.mubr.bf16.mxu0 0
    %757 = vmatmul.mubr.bf16.gmra.mxu0 %v673
    %v758 = vpop.f32.mrf.mxu0
    %v759 = vadd.f32 0.0, %v758
    %v760 = vpop.f32.mrf.mxu0
    %v761 = vpop.f32.mrf.mxu0
    %v762 = vadd.f32 0.0, %v761
    %v763 = vpop.f32.mrf.mxu0
    %764 = vmatprep.mubr.bf16.mxu0 0
    %765 = vmatmul.mubr.bf16.gmra.mxu0 %v674
    %v766 = vpop.f32.mrf.mxu0
    %v767 = vadd.f32 0.0, %v766
    %v768 = vpop.f32.mrf.mxu0
    %v769 = vpop.f32.mrf.mxu0
    %v770 = vadd.f32 0.0, %v769
    %v771 = vpop.f32.mrf.mxu0
    %772 = vmatprep.mubr.bf16.mxu0 0
    %773 = vmatmul.mubr.bf16.gmra.mxu0 %v675
    %v774 = vpop.f32.mrf.mxu0
    %v775 = vadd.f32 0.0, %v774
    %v776 = vpop.f32.mrf.mxu0
    %v777 = vpop.f32.mrf.mxu0
    %v778 = vadd.f32 0.0, %v777
    %v779 = vpop.f32.mrf.mxu0
    %780 = vdwg.mxu0
    %v781 = vmul.f32 %v719, 0.125
    %v782 = vmul.f32 %v722, 0.125
    %v783 = vmul.f32 %v727, 0.125
    %v784 = vmul.f32 %v730, 0.125
    %v785 = vmul.f32 %v735, 0.125
    %v786 = vmul.f32 %v738, 0.125
    %v787 = vmul.f32 %v743, 0.125
    %v788 = vmul.f32 %v746, 0.125
    %v789 = vmul.f32 %v751, 0.125
    %v790 = vmul.f32 %v754, 0.125
    %v791 = vmul.f32 %v759, 0.125
    %v792 = vmul.f32 %v762, 0.125
    %v793 = vmul.f32 %v767, 0.125
    %v794 = vmul.f32 %v770, 0.125
    %v795 = vmul.f32 %v775, 0.125
    %v796 = vmul.f32 %v778, 0.125
    %v797 = vlaneseq
    %v798 = vshrl.u32 %v797, 7
    %v799 = vadd.s32 %v798, 8
    %v800 = vadd.s32 %v798, 16
    %v801 = vadd.s32 %v798, 24
    %v802 = vadd.s32 %v798, 32
    %v803 = vadd.s32 %v798, 40
    %v804 = vadd.s32 %v798, 48
    %v805 = vadd.s32 %v798, 56
    %v806 = vadd.s32 %v798, 64
    %v807 = vadd.s32 %v798, 72
    %v808 = vadd.s32 %v798, 80
    %v809 = vadd.s32 %v798, 88
    %v810 = vadd.s32 %v798, 96
    %v811 = vadd.s32 %v798, 104
    %v812 = vadd.s32 %v798, 112
    %v813 = vadd.s32 %v798, 120
    %v814 = vlaneseq
    %v815 = vand.u32 %v814, 127
    %vm816 = vcmp.gt.bf16.partialorder %v43, 0
    %vm817 = vcmp.gt.bf16.partialorder %v44, 0
    %vm818 = vcmp.gt.bf16.partialorder %v45, 0
    %vm819 = vcmp.gt.bf16.partialorder %v46, 0
    %vm820 = vcmp.gt.bf16.partialorder %v47, 0
    %vm821 = vcmp.gt.bf16.partialorder %v48, 0
    %vm822 = vcmp.gt.bf16.partialorder %v49, 0
    %vm823 = vcmp.gt.bf16.partialorder %v50, 0
    %vm824 = vcmp.gt.bf16.partialorder %v51, 0
    %vm825 = vcmp.gt.bf16.partialorder %v52, 0
    %vm826 = vcmp.gt.bf16.partialorder %v53, 0
    %vm827 = vcmp.gt.bf16.partialorder %v54, 0
    %vm828 = vcmp.gt.bf16.partialorder %v55, 0
    %vm829 = vcmp.gt.bf16.partialorder %v56, 0
    %vm830 = vcmp.gt.bf16.partialorder %v57, 0
    %vm831 = vcmp.gt.bf16.partialorder %v58, 0
    %vm832 = vcmp.ne.s32.totalorder %v798, %v815
    %vm833 = vcmp.ne.s32.totalorder %v799, %v815
    %vm834 = vcmp.ne.s32.totalorder %v800, %v815
    %vm835 = vcmp.ne.s32.totalorder %v801, %v815
    %vm836 = vcmp.ne.s32.totalorder %v802, %v815
    %vm837 = vcmp.ne.s32.totalorder %v803, %v815
    %vm838 = vcmp.ne.s32.totalorder %v804, %v815
    %vm839 = vcmp.ne.s32.totalorder %v805, %v815
    %vm840 = vcmp.ne.s32.totalorder %v806, %v815
    %vm841 = vcmp.ne.s32.totalorder %v807, %v815
    %vm842 = vcmp.ne.s32.totalorder %v808, %v815
    %vm843 = vcmp.ne.s32.totalorder %v809, %v815
    %vm844 = vcmp.ne.s32.totalorder %v810, %v815
    %vm845 = vcmp.ne.s32.totalorder %v811, %v815
    %vm846 = vcmp.ne.s32.totalorder %v812, %v815
    %vm847 = vcmp.ne.s32.totalorder %v813, %v815
    %vm848 = vmpackc.low %vm832, %vm832
    %vm849 = vmpackc.low %vm833, %vm833
    %vm850 = vmpackc.low %vm834, %vm834
    %vm851 = vmpackc.low %vm835, %vm835
    %vm852 = vmpackc.low %vm836, %vm836
    %vm853 = vmpackc.low %vm837, %vm837
    %vm854 = vmpackc.low %vm838, %vm838
    %vm855 = vmpackc.low %vm839, %vm839
    %vm856 = vmpackc.low %vm840, %vm840
    %vm857 = vmpackc.low %vm841, %vm841
    %vm858 = vmpackc.low %vm842, %vm842
    %vm859 = vmpackc.low %vm843, %vm843
    %vm860 = vmpackc.low %vm844, %vm844
    %vm861 = vmpackc.low %vm845, %vm845
    %vm862 = vmpackc.low %vm846, %vm846
    %vm863 = vmpackc.low %vm847, %vm847
    %vm864 = vmand %vm816, %vm848
    %vm865 = vmand %vm817, %vm849
    %vm866 = vmand %vm818, %vm850
    %vm867 = vmand %vm819, %vm851
    %vm868 = vmand %vm820, %vm852
    %vm869 = vmand %vm821, %vm853
    %vm870 = vmand %vm822, %vm854
    %vm871 = vmand %vm823, %vm855
    %vm872 = vmand %vm824, %vm856
    %vm873 = vmand %vm825, %vm857
    %vm874 = vmand %vm826, %vm858
    %vm875 = vmand %vm827, %vm859
    %vm876 = vmand %vm828, %vm860
    %vm877 = vmand %vm829, %vm861
    %vm878 = vmand %vm830, %vm862
    %vm879 = vmand %vm831, %vm863
    %v880 = vsel %vm864, 65537, 0
    %v881 = vsel %vm865, 65537, 0
    %v882 = vsel %vm866, 65537, 0
    %v883 = vsel %vm867, 65537, 0
    %v884 = vsel %vm868, 65537, 0
    %v885 = vsel %vm869, 65537, 0
    %v886 = vsel %vm870, 65537, 0
    %v887 = vsel %vm871, 65537, 0
    %v888 = vsel %vm872, 65537, 0
    %v889 = vsel %vm873, 65537, 0
    %v890 = vsel %vm874, 65537, 0
    %v891 = vsel %vm875, 65537, 0
    %v892 = vsel %vm876, 65537, 0
    %v893 = vsel %vm877, 65537, 0
    %v894 = vsel %vm878, 65537, 0
    %v895 = vsel %vm879, 65537, 0
    %v896 = vunpack.c.l.b16 %v880
    %v897 = vunpack.c.l.b16 %v881
    %v898 = vunpack.c.l.b16 %v882
    %v899 = vunpack.c.l.b16 %v883
    %v900 = vunpack.c.l.b16 %v884
    %v901 = vunpack.c.l.b16 %v885
    %v902 = vunpack.c.l.b16 %v886
    %v903 = vunpack.c.l.b16 %v887
    %v904 = vunpack.c.l.b16 %v888
    %v905 = vunpack.c.l.b16 %v889
    %v906 = vunpack.c.l.b16 %v890
    %v907 = vunpack.c.l.b16 %v891
    %v908 = vunpack.c.l.b16 %v892
    %v909 = vunpack.c.l.b16 %v893
    %v910 = vunpack.c.l.b16 %v894
    %v911 = vunpack.c.l.b16 %v895
    %vm912 = vcmp.ne.s32.totalorder %v896, 0
    %vm913 = vcmp.ne.s32.totalorder %v897, 0
    %vm914 = vcmp.ne.s32.totalorder %v898, 0
    %vm915 = vcmp.ne.s32.totalorder %v899, 0
    %vm916 = vcmp.ne.s32.totalorder %v900, 0
    %vm917 = vcmp.ne.s32.totalorder %v901, 0
    %vm918 = vcmp.ne.s32.totalorder %v902, 0
    %vm919 = vcmp.ne.s32.totalorder %v903, 0
    %vm920 = vcmp.ne.s32.totalorder %v904, 0
    %vm921 = vcmp.ne.s32.totalorder %v905, 0
    %vm922 = vcmp.ne.s32.totalorder %v906, 0
    %vm923 = vcmp.ne.s32.totalorder %v907, 0
    %vm924 = vcmp.ne.s32.totalorder %v908, 0
    %vm925 = vcmp.ne.s32.totalorder %v909, 0
    %vm926 = vcmp.ne.s32.totalorder %v910, 0
    %vm927 = vcmp.ne.s32.totalorder %v911, 0
    %v928 = vsel %vm912, %v781, -1e+30
    %v929 = vsel %vm913, %v782, -1e+30
    %v930 = vsel %vm914, %v783, -1e+30
    %v931 = vsel %vm915, %v784, -1e+30
    %v932 = vsel %vm916, %v785, -1e+30
    %v933 = vsel %vm917, %v786, -1e+30
    %v934 = vsel %vm918, %v787, -1e+30
    %v935 = vsel %vm919, %v788, -1e+30
    %v936 = vsel %vm920, %v789, -1e+30
    %v937 = vsel %vm921, %v790, -1e+30
    %v938 = vsel %vm922, %v791, -1e+30
    %v939 = vsel %vm923, %v792, -1e+30
    %v940 = vsel %vm924, %v793, -1e+30
    %v941 = vsel %vm925, %v794, -1e+30
    %v942 = vsel %vm926, %v795, -1e+30
    %v943 = vsel %vm927, %v796, -1e+30
    %944 = vmax.xlane.f32.xlu0 %v928
    %v945 = vpop.xlane.xlu0 %944
    %946 = vmax.xlane.f32.xlu0 %v929
    %v947 = vpop.xlane.xlu0 %946
    %948 = vmax.xlane.f32.xlu0 %v930
    %v949 = vpop.xlane.xlu0 %948
    %950 = vmax.xlane.f32.xlu0 %v931
    %v951 = vpop.xlane.xlu0 %950
    %952 = vmax.xlane.f32.xlu0 %v932
    %v953 = vpop.xlane.xlu0 %952
    %954 = vmax.xlane.f32.xlu0 %v933
    %v955 = vpop.xlane.xlu0 %954
    %956 = vmax.xlane.f32.xlu0 %v934
    %v957 = vpop.xlane.xlu0 %956
    %958 = vmax.xlane.f32.xlu0 %v935
    %v959 = vpop.xlane.xlu0 %958
    %960 = vmax.xlane.f32.xlu0 %v936
    %v961 = vpop.xlane.xlu0 %960
    %962 = vmax.xlane.f32.xlu0 %v937
    %v963 = vpop.xlane.xlu0 %962
    %964 = vmax.xlane.f32.xlu0 %v938
    %v965 = vpop.xlane.xlu0 %964
    %966 = vmax.xlane.f32.xlu0 %v939
    %v967 = vpop.xlane.xlu0 %966
    %968 = vmax.xlane.f32.xlu0 %v940
    %v969 = vpop.xlane.xlu0 %968
    %970 = vmax.xlane.f32.xlu0 %v941
    %v971 = vpop.xlane.xlu0 %970
    %972 = vmax.xlane.f32.xlu0 %v942
    %v973 = vpop.xlane.xlu0 %972
    %974 = vmax.xlane.f32.xlu0 %v943
    %v975 = vpop.xlane.xlu0 %974
    %v976 = vsub.f32 %v928, %v945
    %v977 = vsub.f32 %v929, %v947
    %v978 = vsub.f32 %v930, %v949
    %v979 = vsub.f32 %v931, %v951
    %v980 = vsub.f32 %v932, %v953
    %v981 = vsub.f32 %v933, %v955
    %v982 = vsub.f32 %v934, %v957
    %v983 = vsub.f32 %v935, %v959
    %v984 = vsub.f32 %v936, %v961
    %v985 = vsub.f32 %v937, %v963
    %v986 = vsub.f32 %v938, %v965
    %v987 = vsub.f32 %v939, %v967
    %v988 = vsub.f32 %v940, %v969
    %v989 = vsub.f32 %v941, %v971
    %v990 = vsub.f32 %v942, %v973
    %v991 = vsub.f32 %v943, %v975
    %v992 = vmul.f32 %v976, 1.442695
    %v993 = vpow.pop %v992
    %v994 = vmul.f32 %v977, 1.442695
    %v995 = vpow.pop %v994
    %v996 = vmul.f32 %v978, 1.442695
    %v997 = vpow.pop %v996
    %v998 = vmul.f32 %v979, 1.442695
    %v999 = vpow.pop %v998
    %v1000 = vmul.f32 %v980, 1.442695
    %v1001 = vpow.pop %v1000
    %v1002 = vmul.f32 %v981, 1.442695
    %v1003 = vpow.pop %v1002
    %v1004 = vmul.f32 %v982, 1.442695
    %v1005 = vpow.pop %v1004
    %v1006 = vmul.f32 %v983, 1.442695
    %v1007 = vpow.pop %v1006
    %v1008 = vmul.f32 %v984, 1.442695
    %v1009 = vpow.pop %v1008
    %v1010 = vmul.f32 %v985, 1.442695
    %v1011 = vpow.pop %v1010
    %v1012 = vmul.f32 %v986, 1.442695
    %v1013 = vpow.pop %v1012
    %v1014 = vmul.f32 %v987, 1.442695
    %v1015 = vpow.pop %v1014
    %v1016 = vmul.f32 %v988, 1.442695
    %v1017 = vpow.pop %v1016
    %v1018 = vmul.f32 %v989, 1.442695
    %v1019 = vpow.pop %v1018
    %v1020 = vmul.f32 %v990, 1.442695
    %v1021 = vpow.pop %v1020
    %v1022 = vmul.f32 %v991, 1.442695
    %v1023 = vpow.pop %v1022
    %v1024 = vsel %vm912, %v993, 0.0
    %v1025 = vsel %vm913, %v995, 0.0
    %v1026 = vsel %vm914, %v997, 0.0
    %v1027 = vsel %vm915, %v999, 0.0
    %v1028 = vsel %vm916, %v1001, 0.0
    %v1029 = vsel %vm917, %v1003, 0.0
    %v1030 = vsel %vm918, %v1005, 0.0
    %v1031 = vsel %vm919, %v1007, 0.0
    %v1032 = vsel %vm920, %v1009, 0.0
    %v1033 = vsel %vm921, %v1011, 0.0
    %v1034 = vsel %vm922, %v1013, 0.0
    %v1035 = vsel %vm923, %v1015, 0.0
    %v1036 = vsel %vm924, %v1017, 0.0
    %v1037 = vsel %vm925, %v1019, 0.0
    %v1038 = vsel %vm926, %v1021, 0.0
    %v1039 = vsel %vm927, %v1023, 0.0
    %1040 = vadd.xlane.f32.xlu0 %v1024
    %v1041 = vpop.xlane.xlu0 %1040
    %1042 = vadd.xlane.f32.xlu0 %v1025
    %v1043 = vpop.xlane.xlu0 %1042
    %1044 = vadd.xlane.f32.xlu0 %v1026
    %v1045 = vpop.xlane.xlu0 %1044
    %1046 = vadd.xlane.f32.xlu0 %v1027
    %v1047 = vpop.xlane.xlu0 %1046
    %1048 = vadd.xlane.f32.xlu0 %v1028
    %v1049 = vpop.xlane.xlu0 %1048
    %1050 = vadd.xlane.f32.xlu0 %v1029
    %v1051 = vpop.xlane.xlu0 %1050
    %1052 = vadd.xlane.f32.xlu0 %v1030
    %v1053 = vpop.xlane.xlu0 %1052
    %1054 = vadd.xlane.f32.xlu0 %v1031
    %v1055 = vpop.xlane.xlu0 %1054
    %1056 = vadd.xlane.f32.xlu0 %v1032
    %v1057 = vpop.xlane.xlu0 %1056
    %1058 = vadd.xlane.f32.xlu0 %v1033
    %v1059 = vpop.xlane.xlu0 %1058
    %1060 = vadd.xlane.f32.xlu0 %v1034
    %v1061 = vpop.xlane.xlu0 %1060
    %1062 = vadd.xlane.f32.xlu0 %v1035
    %v1063 = vpop.xlane.xlu0 %1062
    %1064 = vadd.xlane.f32.xlu0 %v1036
    %v1065 = vpop.xlane.xlu0 %1064
    %1066 = vadd.xlane.f32.xlu0 %v1037
    %v1067 = vpop.xlane.xlu0 %1066
    %1068 = vadd.xlane.f32.xlu0 %v1038
    %v1069 = vpop.xlane.xlu0 %1068
    %1070 = vadd.xlane.f32.xlu0 %v1039
    %v1071 = vpop.xlane.xlu0 %1070
    %v1072 = vmax.f32 %v1041, 1e-30
    %v1073 = vmax.f32 %v1043, 1e-30
    %v1074 = vmax.f32 %v1045, 1e-30
    %v1075 = vmax.f32 %v1047, 1e-30
    %v1076 = vmax.f32 %v1049, 1e-30
    %v1077 = vmax.f32 %v1051, 1e-30
    %v1078 = vmax.f32 %v1053, 1e-30
    %v1079 = vmax.f32 %v1055, 1e-30
    %v1080 = vmax.f32 %v1057, 1e-30
    %v1081 = vmax.f32 %v1059, 1e-30
    %v1082 = vmax.f32 %v1061, 1e-30
    %v1083 = vmax.f32 %v1063, 1e-30
    %v1084 = vmax.f32 %v1065, 1e-30
    %v1085 = vmax.f32 %v1067, 1e-30
    %v1086 = vmax.f32 %v1069, 1e-30
    %v1087 = vmax.f32 %v1071, 1e-30
    %v1088 = vrcp.pop %v1072
    %v1089 = vrcp.pop %v1073
    %v1090 = vrcp.pop %v1074
    %v1091 = vrcp.pop %v1075
    %v1092 = vrcp.pop %v1076
    %v1093 = vrcp.pop %v1077
    %v1094 = vrcp.pop %v1078
    %v1095 = vrcp.pop %v1079
    %v1096 = vrcp.pop %v1080
    %v1097 = vrcp.pop %v1081
    %v1098 = vrcp.pop %v1082
    %v1099 = vrcp.pop %v1083
    %v1100 = vrcp.pop %v1084
    %v1101 = vrcp.pop %v1085
    %v1102 = vrcp.pop %v1086
    %v1103 = vrcp.pop %v1087
    %v1104 = vmul.f32 %v1024, %v1088
    %v1105 = vmul.f32 %v1025, %v1089
    %v1106 = vmul.f32 %v1026, %v1090
    %v1107 = vmul.f32 %v1027, %v1091
    %v1108 = vmul.f32 %v1028, %v1092
    %v1109 = vmul.f32 %v1029, %v1093
    %v1110 = vmul.f32 %v1030, %v1094
    %v1111 = vmul.f32 %v1031, %v1095
    %v1112 = vmul.f32 %v1032, %v1096
    %v1113 = vmul.f32 %v1033, %v1097
    %v1114 = vmul.f32 %v1034, %v1098
    %v1115 = vmul.f32 %v1035, %v1099
    %v1116 = vmul.f32 %v1036, %v1100
    %v1117 = vmul.f32 %v1037, %v1101
    %v1118 = vmul.f32 %v1038, %v1102
    %v1119 = vmul.f32 %v1039, %v1103
    %v1120 = vpack.c.bf16 %v1105, %v1104
    %v1121 = vpack.c.bf16 %v1107, %v1106
    %v1122 = vpack.c.bf16 %v1109, %v1108
    %v1123 = vpack.c.bf16 %v1111, %v1110
    %v1124 = vpack.c.bf16 %v1113, %v1112
    %v1125 = vpack.c.bf16 %v1115, %v1114
    %v1126 = vpack.c.bf16 %v1117, %v1116
    %v1127 = vpack.c.bf16 %v1119, %v1118
    %v1128 = vpack.c.bf16 %v594, %v590
    %v1129 = vpack.c.bf16 %v604, %v600
    %v1130 = vpack.c.bf16 %v614, %v610
    %v1131 = vpack.c.bf16 %v624, %v620
    %v1132 = vpack.c.bf16 %v634, %v630
    %v1133 = vpack.c.bf16 %v644, %v640
    %v1134 = vpack.c.bf16 %v654, %v650
    %v1135 = vpack.c.bf16 %v664, %v660
    %1136 = vmatprep.subr.bf16.mxu0 0
    %1137 = vmatpush1.bf16.msra.mxu0 %v1135
    %1138 = vmatprep.subr.bf16.mxu0 0
    %1139 = vmatpush1.bf16.msra.mxu0 %v1134
    %1140 = vmatprep.subr.bf16.mxu0 0
    %1141 = vmatpush1.bf16.msra.mxu0 %v1133
    %1142 = vmatprep.subr.bf16.mxu0 0
    %1143 = vmatpush1.bf16.msra.mxu0 %v1132
    %1144 = vmatprep.subr.bf16.mxu0 0
    %1145 = vmatpush1.bf16.msra.mxu0 %v1131
    %1146 = vmatprep.subr.bf16.mxu0 0
    %1147 = vmatpush1.bf16.msra.mxu0 %v1130
    %1148 = vmatprep.subr.bf16.mxu0 0
    %1149 = vmatpush1.bf16.msra.mxu0 %v1129
    %1150 = vmatprep.subr.bf16.mxu0 0
    %1151 = vmatpush1.bf16.msra.mxu0 %v1128
    %1152 = vmatprep.subr.bf16.mxu0 0
    %1153 = vmatpush2.bf16.msra.mxu0 0
    %1154 = vmatprep.subr.bf16.mxu0 0
    %1155 = vmatpush2.bf16.msra.mxu0 0
    %1156 = vmatprep.subr.bf16.mxu0 0
    %1157 = vmatpush2.bf16.msra.mxu0 0
    %1158 = vmatprep.subr.bf16.mxu0 0
    %1159 = vmatpush2.bf16.msra.mxu0 0
    %1160 = vmatprep.subr.bf16.mxu0 0
    %1161 = vmatpush2.bf16.msra.mxu0 0
    %1162 = vmatprep.subr.bf16.mxu0 0
    %1163 = vmatpush2.bf16.msra.mxu0 0
    %1164 = vmatprep.subr.bf16.mxu0 0
    %1165 = vmatpush2.bf16.msra.mxu0 0
    %1166 = vmatprep.subr.bf16.mxu0 0
    %1167 = vmatpush2.bf16.msra.mxu0 0
    %1168 = vmatprep.mubr.bf16.mxu0 0
    %1169 = vmatmul.mubr.bf16.gmra.mxu0 %v1120
    %v1170 = vpop.f32.mrf.mxu0
    %v1171 = vadd.f32 %v592, %v1170
    %v1172 = vpop.f32.mrf.mxu0
    %v1173 = vpop.f32.mrf.mxu0
    %v1174 = vadd.f32 %v596, %v1173
    %v1175 = vpop.f32.mrf.mxu0
    %1176 = vmatprep.mubr.bf16.mxu0 0
    %1177 = vmatmul.mubr.bf16.gmra.mxu0 %v1121
    %v1178 = vpop.f32.mrf.mxu0
    %v1179 = vadd.f32 %v602, %v1178
    %v1180 = vpop.f32.mrf.mxu0
    %v1181 = vpop.f32.mrf.mxu0
    %v1182 = vadd.f32 %v606, %v1181
    %v1183 = vpop.f32.mrf.mxu0
    %1184 = vmatprep.mubr.bf16.mxu0 0
    %1185 = vmatmul.mubr.bf16.gmra.mxu0 %v1122
    %v1186 = vpop.f32.mrf.mxu0
    %v1187 = vadd.f32 %v612, %v1186
    %v1188 = vpop.f32.mrf.mxu0
    %v1189 = vpop.f32.mrf.mxu0
    %v1190 = vadd.f32 %v616, %v1189
    %v1191 = vpop.f32.mrf.mxu0
    %1192 = vmatprep.mubr.bf16.mxu0 0
    %1193 = vmatmul.mubr.bf16.gmra.mxu0 %v1123
    %v1194 = vpop.f32.mrf.mxu0
    %v1195 = vadd.f32 %v622, %v1194
    %v1196 = vpop.f32.mrf.mxu0
    %v1197 = vpop.f32.mrf.mxu0
    %v1198 = vadd.f32 %v626, %v1197
    %v1199 = vpop.f32.mrf.mxu0
    %1200 = vmatprep.mubr.bf16.mxu0 0
    %1201 = vmatmul.mubr.bf16.gmra.mxu0 %v1124
    %v1202 = vpop.f32.mrf.mxu0
    %v1203 = vadd.f32 %v632, %v1202
    %v1204 = vpop.f32.mrf.mxu0
    %v1205 = vpop.f32.mrf.mxu0
    %v1206 = vadd.f32 %v636, %v1205
    %v1207 = vpop.f32.mrf.mxu0
    %1208 = vmatprep.mubr.bf16.mxu0 0
    %1209 = vmatmul.mubr.bf16.gmra.mxu0 %v1125
    %v1210 = vpop.f32.mrf.mxu0
    %v1211 = vadd.f32 %v642, %v1210
    %v1212 = vpop.f32.mrf.mxu0
    %v1213 = vpop.f32.mrf.mxu0
    %v1214 = vadd.f32 %v646, %v1213
    %v1215 = vpop.f32.mrf.mxu0
    %1216 = vmatprep.mubr.bf16.mxu0 0
    %1217 = vmatmul.mubr.bf16.gmra.mxu0 %v1126
    %v1218 = vpop.f32.mrf.mxu0
    %v1219 = vadd.f32 %v652, %v1218
    %v1220 = vpop.f32.mrf.mxu0
    %v1221 = vpop.f32.mrf.mxu0
    %v1222 = vadd.f32 %v656, %v1221
    %v1223 = vpop.f32.mrf.mxu0
    %1224 = vmatprep.mubr.bf16.mxu0 0
    %1225 = vmatmul.mubr.bf16.gmra.mxu0 %v1127
    %v1226 = vpop.f32.mrf.mxu0
    %v1227 = vadd.f32 %v662, %v1226
    %v1228 = vpop.f32.mrf.mxu0
    %v1229 = vpop.f32.mrf.mxu0
    %v1230 = vadd.f32 %v666, %v1229
    %v1231 = vpop.f32.mrf.mxu0
    %1232 = vdwg.mxu0
    %v1233 = vpack.c.bf16 %v1174, %v1171
    %v1234 = vpack.c.bf16 %v1182, %v1179
    %v1235 = vpack.c.bf16 %v1190, %v1187
    %v1236 = vpack.c.bf16 %v1198, %v1195
    %v1237 = vpack.c.bf16 %v1206, %v1203
    %v1238 = vpack.c.bf16 %v1214, %v1211
    %v1239 = vpack.c.bf16 %v1222, %v1219
    %v1240 = vpack.c.bf16 %v1230, %v1227
    %v1241 = vld [vmem:[#allocation2] sm:$0xf]
    %v1242 = vld [vmem:[#allocation2 + $0x4] sm:$0xf]
    %v1243 = vld [vmem:[#allocation2 + $0x8] sm:$0xf]
    %v1244 = vld [vmem:[#allocation2 + $0xc] sm:$0xf]
    %v1245 = vld [vmem:[#allocation2 + $0x10] sm:$0xf]
    %v1246 = vld [vmem:[#allocation2 + $0x14] sm:$0xf]
    %v1247 = vld [vmem:[#allocation2 + $0x18] sm:$0xf]
    %v1248 = vld [vmem:[#allocation2 + $0x1c] sm:$0xf]
    %v1249 = vld [vmem:[#allocation2 + $0x20] sm:$0xf]
    %v1250 = vld [vmem:[#allocation2 + $0x24] sm:$0xf]
    %v1251 = vld [vmem:[#allocation2 + $0x28] sm:$0xf]
    %v1252 = vld [vmem:[#allocation2 + $0x2c] sm:$0xf]
    %v1253 = vld [vmem:[#allocation2 + $0x30] sm:$0xf]
    %v1254 = vld [vmem:[#allocation2 + $0x34] sm:$0xf]
    %v1255 = vld [vmem:[#allocation2 + $0x38] sm:$0xf]
    %v1256 = vld [vmem:[#allocation2 + $0x3c] sm:$0xf]
    %v1273 = vunpack.c.l.b16 %v1241
    %v1274 = vunpack.c.l.b16 %v1242
    %v1275 = vunpack.c.l.b16 %v1243
    %v1276 = vunpack.c.l.b16 %v1244
    %v1277 = vunpack.c.l.b16 %v1245
    %v1278 = vunpack.c.l.b16 %v1246
    %v1279 = vunpack.c.l.b16 %v1247
    %v1280 = vunpack.c.l.b16 %v1248
    %v1281 = vunpack.c.l.b16 %v1249
    %v1282 = vunpack.c.l.b16 %v1250
    %v1283 = vunpack.c.l.b16 %v1251
    %v1284 = vunpack.c.l.b16 %v1252
    %v1285 = vunpack.c.l.b16 %v1253
    %v1286 = vunpack.c.l.b16 %v1254
    %v1287 = vunpack.c.l.b16 %v1255
    %v1288 = vunpack.c.l.b16 %v1256
    %v1289 = vpack.c.b16 %v1274, %v1273
    %v1290 = vpack.c.b16 %v1276, %v1275
    %v1291 = vpack.c.b16 %v1278, %v1277
    %v1292 = vpack.c.b16 %v1280, %v1279
    %v1293 = vpack.c.b16 %v1282, %v1281
    %v1294 = vpack.c.b16 %v1284, %v1283
    %v1295 = vpack.c.b16 %v1286, %v1285
    %v1296 = vpack.c.b16 %v1288, %v1287
    %1305 = vmatprep.subr.bf16.mxu0 0
    %1306 = vmatpush1.bf16.msra.mxu0 %v1296
    %1307 = vmatprep.subr.bf16.mxu0 0
    %1308 = vmatpush1.bf16.msra.mxu0 %v1295
    %1309 = vmatprep.subr.bf16.mxu0 0
    %1310 = vmatpush1.bf16.msra.mxu0 %v1294
    %1311 = vmatprep.subr.bf16.mxu0 0
    %1312 = vmatpush1.bf16.msra.mxu0 %v1293
    %1313 = vmatprep.subr.bf16.mxu0 0
    %1314 = vmatpush1.bf16.msra.mxu0 %v1292
    %1315 = vmatprep.subr.bf16.mxu0 0
    %1316 = vmatpush1.bf16.msra.mxu0 %v1291
    %1317 = vmatprep.subr.bf16.mxu0 0
    %1318 = vmatpush1.bf16.msra.mxu0 %v1290
    %1319 = vmatprep.subr.bf16.mxu0 0
    %1320 = vmatpush1.bf16.msra.mxu0 %v1289
    %1321 = vmatprep.subr.bf16.mxu0 0
    %1322 = vmatpush2.bf16.msra.mxu0 0
    %1323 = vmatprep.subr.bf16.mxu0 0
    %1324 = vmatpush2.bf16.msra.mxu0 0
    %1325 = vmatprep.subr.bf16.mxu0 0
    %1326 = vmatpush2.bf16.msra.mxu0 0
    %1327 = vmatprep.subr.bf16.mxu0 0
    %1328 = vmatpush2.bf16.msra.mxu0 0
    %1329 = vmatprep.subr.bf16.mxu0 0
    %1330 = vmatpush2.bf16.msra.mxu0 0
    %1331 = vmatprep.subr.bf16.mxu0 0
    %1332 = vmatpush2.bf16.msra.mxu0 0
    %1333 = vmatprep.subr.bf16.mxu0 0
    %1334 = vmatpush2.bf16.msra.mxu0 0
    %1335 = vmatprep.subr.bf16.mxu0 0
    %1336 = vmatpush2.bf16.msra.mxu0 0
    %1337 = vmatprep.mubr.bf16.mxu0 0
    %1338 = vmatmul.mubr.bf16.gmra.mxu0 %v1233
    %v1339 = vpop.f32.mrf.mxu0
    %v1340 = vadd.f32 0.0, %v1339
    %v1341 = vpop.f32.mrf.mxu0
    %v1342 = vpop.f32.mrf.mxu0
    %v1343 = vadd.f32 0.0, %v1342
    %v1344 = vpop.f32.mrf.mxu0
    %1345 = vmatprep.mubr.bf16.mxu0 0
    %1346 = vmatmul.mubr.bf16.gmra.mxu0 %v1234
    %v1347 = vpop.f32.mrf.mxu0
    %v1348 = vadd.f32 0.0, %v1347
    %v1349 = vpop.f32.mrf.mxu0
    %v1350 = vpop.f32.mrf.mxu0
    %v1351 = vadd.f32 0.0, %v1350
    %v1352 = vpop.f32.mrf.mxu0
    %1353 = vmatprep.mubr.bf16.mxu0 0
    %1354 = vmatmul.mubr.bf16.gmra.mxu0 %v1235
    %v1355 = vpop.f32.mrf.mxu0
    %v1356 = vadd.f32 0.0, %v1355
    %v1357 = vpop.f32.mrf.mxu0
    %v1358 = vpop.f32.mrf.mxu0
    %v1359 = vadd.f32 0.0, %v1358
    %v1360 = vpop.f32.mrf.mxu0
    %1361 = vmatprep.mubr.bf16.mxu0 0
    %1362 = vmatmul.mubr.bf16.gmra.mxu0 %v1236
    %v1363 = vpop.f32.mrf.mxu0
    %v1364 = vadd.f32 0.0, %v1363
    %v1365 = vpop.f32.mrf.mxu0
    %v1366 = vpop.f32.mrf.mxu0
    %v1367 = vadd.f32 0.0, %v1366
    %v1368 = vpop.f32.mrf.mxu0
    %1369 = vmatprep.mubr.bf16.mxu0 0
    %1370 = vmatmul.mubr.bf16.gmra.mxu0 %v1237
    %v1371 = vpop.f32.mrf.mxu0
    %v1372 = vadd.f32 0.0, %v1371
    %v1373 = vpop.f32.mrf.mxu0
    %v1374 = vpop.f32.mrf.mxu0
    %v1375 = vadd.f32 0.0, %v1374
    %v1376 = vpop.f32.mrf.mxu0
    %1377 = vmatprep.mubr.bf16.mxu0 0
    %1378 = vmatmul.mubr.bf16.gmra.mxu0 %v1238
    %v1379 = vpop.f32.mrf.mxu0
    %v1380 = vadd.f32 0.0, %v1379
    %v1381 = vpop.f32.mrf.mxu0
    %v1382 = vpop.f32.mrf.mxu0
    %v1383 = vadd.f32 0.0, %v1382
    %v1384 = vpop.f32.mrf.mxu0
    %1385 = vmatprep.mubr.bf16.mxu0 0
    %1386 = vmatmul.mubr.bf16.gmra.mxu0 %v1239
    %v1387 = vpop.f32.mrf.mxu0
    %v1388 = vadd.f32 0.0, %v1387
    %v1389 = vpop.f32.mrf.mxu0
    %v1390 = vpop.f32.mrf.mxu0
    %v1391 = vadd.f32 0.0, %v1390
    %v1392 = vpop.f32.mrf.mxu0
    %1393 = vmatprep.mubr.bf16.mxu0 0
    %1394 = vmatmul.mubr.bf16.gmra.mxu0 %v1240
    %v1395 = vpop.f32.mrf.mxu0
    %v1396 = vadd.f32 0.0, %v1395
    %v1397 = vpop.f32.mrf.mxu0
    %v1398 = vpop.f32.mrf.mxu0
    %v1399 = vadd.f32 0.0, %v1398
    %v1400 = vpop.f32.mrf.mxu0
    %1401 = vdwg.mxu0
    %v1402 = vpack.c.bf16 %v1343, %v1340
    %v1403 = vpack.c.bf16 %v1351, %v1348
    %v1404 = vpack.c.bf16 %v1359, %v1356
    %v1405 = vpack.c.bf16 %v1367, %v1364
    %v1406 = vpack.c.bf16 %v1375, %v1372
    %v1407 = vpack.c.bf16 %v1383, %v1380
    %v1408 = vpack.c.bf16 %v1391, %v1388
    %v1409 = vpack.c.bf16 %v1399, %v1396
    %v1410 = vld [vmem:[%s6] sm:$0x1]
    %v1412 = vlaneseq
    %v1413 = vshrl.u32 %v1412, 7
    %v1414 = vsub.s32 0, %v1413
    %v1415 = vrot.slane %v1410, %v1414
    %1417 = vmatprep.subr.bf16.mxu0 0
    %1418 = vmatpush1.bf16.msra.mxu0 %v1409
    %1419 = vmatprep.subr.bf16.mxu0 0
    %1420 = vmatpush1.bf16.msra.mxu0 %v1408
    %1421 = vmatprep.subr.bf16.mxu0 0
    %1422 = vmatpush1.bf16.msra.mxu0 %v1407
    %1423 = vmatprep.subr.bf16.mxu0 0
    %1424 = vmatpush1.bf16.msra.mxu0 %v1406
    %1425 = vmatprep.subr.bf16.mxu0 0
    %1426 = vmatpush1.bf16.msra.mxu0 %v1405
    %1427 = vmatprep.subr.bf16.mxu0 0
    %1428 = vmatpush1.bf16.msra.mxu0 %v1404
    %1429 = vmatprep.subr.bf16.mxu0 0
    %1430 = vmatpush1.bf16.msra.mxu0 %v1403
    %1431 = vmatprep.subr.bf16.mxu0 0
    %1432 = vmatpush1.bf16.msra.mxu0 %v1402
    %1433 = vmatprep.subr.bf16.mxu0 0
    %1434 = vmatpush2.bf16.msra.mxu0 0
    %1435 = vmatprep.subr.bf16.mxu0 0
    %1436 = vmatpush2.bf16.msra.mxu0 0
    %1437 = vmatprep.subr.bf16.mxu0 0
    %1438 = vmatpush2.bf16.msra.mxu0 0
    %1439 = vmatprep.subr.bf16.mxu0 0
    %1440 = vmatpush2.bf16.msra.mxu0 0
    %1441 = vmatprep.subr.bf16.mxu0 0
    %1442 = vmatpush2.bf16.msra.mxu0 0
    %1443 = vmatprep.subr.bf16.mxu0 0
    %1444 = vmatpush2.bf16.msra.mxu0 0
    %1445 = vmatprep.subr.bf16.mxu0 0
    %1446 = vmatpush2.bf16.msra.mxu0 0
    %1447 = vmatprep.subr.bf16.mxu0 0
    %1448 = vmatpush2.bf16.msra.mxu0 0
    %1449 = vmatprep.mubr.bf16.mxu0 0
    %1450 = vmatmul.mubr.bf16.gmra.mxu0 %v114
    %v1451 = vpop.f32.mrf.mxu0
    %v1452 = vadd.f32 %v1415, %v1451
    %v1453 = vpop.f32.mrf.mxu0
    %v1454 = vpop.f32.mrf.mxu0
    %v1455 = vadd.f32 %v1415, %v1454
    %v1456 = vpop.f32.mrf.mxu0
    %1457 = vmatprep.mubr.bf16.mxu0 0
    %1458 = vmatmul.mubr.bf16.gmra.mxu0 %v115
    %v1459 = vpop.f32.mrf.mxu0
    %v1460 = vadd.f32 %v1415, %v1459
    %v1461 = vpop.f32.mrf.mxu0
    %v1462 = vpop.f32.mrf.mxu0
    %v1463 = vadd.f32 %v1415, %v1462
    %v1464 = vpop.f32.mrf.mxu0
    %1465 = vmatprep.mubr.bf16.mxu0 0
    %1466 = vmatmul.mubr.bf16.gmra.mxu0 %v116
    %v1467 = vpop.f32.mrf.mxu0
    %v1468 = vadd.f32 %v1415, %v1467
    %v1469 = vpop.f32.mrf.mxu0
    %v1470 = vpop.f32.mrf.mxu0
    %v1471 = vadd.f32 %v1415, %v1470
    %v1472 = vpop.f32.mrf.mxu0
    %1473 = vmatprep.mubr.bf16.mxu0 0
    %1474 = vmatmul.mubr.bf16.gmra.mxu0 %v117
    %v1475 = vpop.f32.mrf.mxu0
    %v1476 = vadd.f32 %v1415, %v1475
    %v1477 = vpop.f32.mrf.mxu0
    %v1478 = vpop.f32.mrf.mxu0
    %v1479 = vadd.f32 %v1415, %v1478
    %v1480 = vpop.f32.mrf.mxu0
    %1481 = vmatprep.mubr.bf16.mxu0 0
    %1482 = vmatmul.mubr.bf16.gmra.mxu0 %v118
    %v1483 = vpop.f32.mrf.mxu0
    %v1484 = vadd.f32 %v1415, %v1483
    %v1485 = vpop.f32.mrf.mxu0
    %v1486 = vpop.f32.mrf.mxu0
    %v1487 = vadd.f32 %v1415, %v1486
    %v1488 = vpop.f32.mrf.mxu0
    %1489 = vmatprep.mubr.bf16.mxu0 0
    %1490 = vmatmul.mubr.bf16.gmra.mxu0 %v119
    %v1491 = vpop.f32.mrf.mxu0
    %v1492 = vadd.f32 %v1415, %v1491
    %v1493 = vpop.f32.mrf.mxu0
    %v1494 = vpop.f32.mrf.mxu0
    %v1495 = vadd.f32 %v1415, %v1494
    %v1496 = vpop.f32.mrf.mxu0
    %1497 = vmatprep.mubr.bf16.mxu0 0
    %1498 = vmatmul.mubr.bf16.gmra.mxu0 %v120
    %v1499 = vpop.f32.mrf.mxu0
    %v1500 = vadd.f32 %v1415, %v1499
    %v1501 = vpop.f32.mrf.mxu0
    %v1502 = vpop.f32.mrf.mxu0
    %v1503 = vadd.f32 %v1415, %v1502
    %v1504 = vpop.f32.mrf.mxu0
    %1505 = vmatprep.mubr.bf16.mxu0 0
    %1506 = vmatmul.mubr.bf16.gmra.mxu0 %v121
    %v1507 = vpop.f32.mrf.mxu0
    %v1508 = vadd.f32 %v1415, %v1507
    %v1509 = vpop.f32.mrf.mxu0
    %v1510 = vpop.f32.mrf.mxu0
    %v1511 = vadd.f32 %v1415, %v1510
    %v1512 = vpop.f32.mrf.mxu0
    %1513 = vdwg.mxu0
    %1514 = vst [vmem:[%s7] sm:$0xff] %v1452
    %1515 = vst [vmem:[%s7 + $0x8] sm:$0xff] %v1455
    %1516 = vst [vmem:[%s7 + $0x10] sm:$0xff] %v1460
    %1517 = vst [vmem:[%s7 + $0x18] sm:$0xff] %v1463
    %1518 = vst [vmem:[%s7 + $0x20] sm:$0xff] %v1468
    %1519 = vst [vmem:[%s7 + $0x28] sm:$0xff] %v1471
    %1520 = vst [vmem:[%s7 + $0x30] sm:$0xff] %v1476
    %1521 = vst [vmem:[%s7 + $0x38] sm:$0xff] %v1479
    %1522 = vst [vmem:[%s7 + $0x40] sm:$0xff] %v1484
    %1523 = vst [vmem:[%s7 + $0x48] sm:$0xff] %v1487
    %1524 = vst [vmem:[%s7 + $0x50] sm:$0xff] %v1492
    %1525 = vst [vmem:[%s7 + $0x58] sm:$0xff] %v1495
    %1526 = vst [vmem:[%s7 + $0x60] sm:$0xff] %v1500
    %1527 = vst [vmem:[%s7 + $0x68] sm:$0xff] %v1503
    %1528 = vst [vmem:[%s7 + $0x70] sm:$0xff] %v1508
    %1529 = vst [vmem:[%s7 + $0x78] sm:$0xff] %v1511
    // Predicated region
    $region34: #{graph_transformer_forward.1} parent=1 // pred_check
      _
    $region35: #{graph_transformer_forward.1} parent=1 // pred_check_branch
      %1531 = sbr.rel (0) target = $region37
    $region36: #{graph_transformer_forward.1} parent=1 // pred_region
      _
    $region37: #{graph_transformer_forward.1} parent=1 // pred_fallthru
      _
    // Predicated region
    $region38: #{graph_transformer_forward.1} parent=1 // pred_check
      _
    $region39: #{graph_transformer_forward.1} parent=1 // pred_check_branch
      %1533 = sbr.rel (0) target = $region41
    $region40: #{graph_transformer_forward.1} parent=1 // pred_region
      _
    $region41: #{graph_transformer_forward.1} parent=1 // pred_fallthru
      _
    %1534 = vsyncpa [#allocation3], 1

</llo_original>
